<compile_context>
chip_gen: v7x
topology: tpu7x:2x2x1
jax: 0.10.0
libtpu: 0.0.40
codegen_flags: <defaults>
</compile_context>

<pallas_src>
import functools

import jax
import jax.numpy as jnp
from jax.experimental import pallas as pl
from jax.experimental.pallas import tpu as pltpu

NUM_CLASSES = 7
PADDED_CLASSES = 8     # classes padded 7 -> 8 (last dim == full array dim; 16x less output HBM)
PADDED_IN = 8          # xyz channel dim padded 3 -> 8


def _relu(x):
    return jnp.maximum(x, 0.0)


def _backbone(x, w1_ref, b1_ref, w2_ref, b2_ref, w3_ref, b3_ref):
    """x: (TN, 8) f32 -> per-point features (TN, 256) f32 (folded-BN conv1/2/3 + ReLU)."""
    # layer 1 kept in f32 (K=8, essentially free); layers 2/3 bf16 operands, f32 accumulation
    h = _relu(jnp.dot(x, w1_ref[...], preferred_element_type=jnp.float32) + b1_ref[...])
    h = _relu(jnp.dot(h.astype(jnp.bfloat16), w2_ref[...],
                      preferred_element_type=jnp.float32) + b2_ref[...])
    pf = _relu(jnp.dot(h.astype(jnp.bfloat16), w3_ref[...],
                       preferred_element_type=jnp.float32) + b3_ref[...])
    return pf


# ----------------------------------------------------------------- fused backbone + seg head
def _fused_kernel(x_ref,
                  w1_ref, b1_ref, w2_ref, b2_ref, w3_ref, b3_ref,
                  f1a_ref, f1b_ref, fb1_ref, f2_ref, fb2_ref, f3_ref, fb3_ref,
                  out_ref, pf_ref, gf_ref, gfb_ref):
    ph = pl.program_id(1)
    t = pl.program_id(2)

    # -------- phase 0: backbone per tile, stash pf (bf16) in VMEM, running global max-pool
    @pl.when(ph == 0)
    def _phase0():
        pf = _backbone(x_ref[0], w1_ref, b1_ref, w2_ref, b2_ref, w3_ref, b3_ref)  # (TN,256) f32
        pf_ref[t] = pf.astype(jnp.bfloat16)
        tile_max = jnp.max(pf, axis=0, keepdims=True)                              # (1, 256)

        @pl.when(t == 0)
        def _init():
            gf_ref[...] = tile_max

        @pl.when(t > 0)
        def _acc():
            gf_ref[...] = jnp.maximum(gf_ref[...], tile_max)

    # -------- phase 1: segmentation head per tile (pf read back from VMEM, no recompute)
    @pl.when(ph == 1)
    def _phase1():
        # hoisted: gfb = gf @ f1b + fb1 computed once per batch element (not per tile)
        @pl.when(t == 0)
        def _gfb():
            gfb_ref[...] = (jnp.dot(gf_ref[...].astype(jnp.bfloat16), f1b_ref[...],
                                    preferred_element_type=jnp.float32) + fb1_ref[...])

        pf16 = pf_ref[t]                                                            # (TN,256) bf16
        # fc1(cat([pf, gf])) split as pf@f1a + (gf@f1b + fb1)  (no concat / broadcast materialized)
        h1 = _relu(jnp.dot(pf16, f1a_ref[...], preferred_element_type=jnp.float32)
                   + gfb_ref[...])                                                  # (TN, 256)
        h2 = _relu(jnp.dot(h1.astype(jnp.bfloat16), f2_ref[...],
                           preferred_element_type=jnp.float32) + fb2_ref[...])      # (TN, 128)
        # narrow (TN, 8) logits store: 32 B/point output HBM traffic (cols 7 is exactly zero)
        out_ref[0] = (jnp.dot(h2.astype(jnp.bfloat16), f3_ref[...],
                              preferred_element_type=jnp.float32) + fb3_ref[...])


# --------------------------------------------------------------------- wrapper
def landmark_segmentation_net(x, params, *, num_points, tile_n=None):
    """x: (B, N, 3) f32 -> per-point logits (B, N, NUM_CLASSES) f32."""
    B, N, C = x.shape
    assert C == 3
    # downsample_points: identity when N == num_points (random resampling not reproduced).
    assert N == num_points, "this synthetic kernel requires N == num_points"

    if tile_n is None:
        tile_n = min(N, 1024)
    assert N % tile_n == 0 and tile_n % 16 == 0
    nt = N // tile_n
    # fused single-pass keeps the whole per-batch pf in VMEM (bf16): 512 B/point.
    # For very large N a two-pass (recompute) fallback would be needed instead.
    assert N * 256 * 2 <= 8 * 1024 * 1024, "pf scratch would not fit VMEM; need two-pass path"

    # lane-friendly input: zero-pad xyz channels 3 -> 8 (w1 rows padded to match).
    # (Low priority per review; could be fused into the kernel's layer-1 load instead.)
    x8 = jnp.pad(x, ((0, 0), (0, 0), (0, PADDED_IN - C)))

    weight_names = ["w1", "b1", "w2", "b2", "w3", "b3",
                    "f1a", "f1b", "fb1", "f2", "fb2", "f3", "fb3"]
    ws = [params[k] for k in weight_names]

    def weight_spec(p):
        nd = p.ndim
        return pl.BlockSpec(p.shape, lambda b, ph, t, _nd=nd: (0,) * _nd)

    vmem_limit = 32 * 1024 * 1024  # leaves headroom even on v7x's 64 MiB VMEM

    # NOTE(v7x): only the batch axis is "parallel"; with B == 1 one TensorCore idles.  For
    # B == 1 the phase-0 reduction could be split (2, nt/2) with a partial-max combine.
    out_pad = pl.pallas_call(
        _fused_kernel,
        out_shape=jax.ShapeDtypeStruct((B, N, PADDED_CLASSES), jnp.float32),
        grid_spec=pltpu.PrefetchScalarGridSpec(
            num_scalar_prefetch=0,
            grid=(B, 2, nt),
            in_specs=[
                # x tile DMA'd only during phase 0 (constant block during phase 1)
                pl.BlockSpec((1, tile_n, PADDED_IN), lambda b, ph, t: (b, t * (1 - ph), 0)),
            ] + [weight_spec(p) for p in ws],
            # output block advances only during phase 1 (single writeback per tile)
            out_specs=pl.BlockSpec((1, tile_n, PADDED_CLASSES), lambda b, ph, t: (b, t * ph, 0)),
            scratch_shapes=[
                pltpu.VMEM((nt, tile_n, 256), jnp.bfloat16),  # pf (per-point features)
                pltpu.VMEM((1, 256), jnp.float32),            # gf (running global max)
                pltpu.VMEM((1, 256), jnp.float32),            # gfb = gf @ f1b + fb1
            ],
        ),
        compiler_params=pltpu.CompilerParams(
            dimension_semantics=("parallel", "arbitrary", "arbitrary"),
            vmem_limit_bytes=vmem_limit),
    )(x8, *ws)

    return out_pad[..., :NUM_CLASSES]


# --------------------------------------------------------------------- parameters
def _fold_bn(w, b, gamma, beta, mean, var, eps=1e-5):
    """Fold eval-mode BatchNorm into a linear layer.  w: (Cin, Cout), b: (Cout,)."""
    scale = gamma / jnp.sqrt(var + eps)
    return w * scale[None, :], (b - mean) * scale + beta


def init_params(key):
    """Float32 'math' parameters (PyTorch-shaped, BN pre-folded)."""
    ks = iter(jax.random.split(key, 40))

    def lin(cin, cout):
        w = 0.1 * jax.random.normal(next(ks), (cin, cout), jnp.float32)
        b = 0.1 * jax.random.normal(next(ks), (cout,), jnp.float32)
        return w, b

    def bn(c):
        gamma = 1.0 + 0.1 * jax.random.normal(next(ks), (c,), jnp.float32)
        beta = 0.1 * jax.random.normal(next(ks), (c,), jnp.float32)
        mean = 0.1 * jax.random.normal(next(ks), (c,), jnp.float32)
        var = 1.0 + 0.1 * jnp.abs(jax.random.normal(next(ks), (c,), jnp.float32))
        return gamma, beta, mean, var

    # backbone: conv1d(k=1) == per-point linear
    w1, b1 = lin(3, 64);    w1, b1 = _fold_bn(w1, b1, *bn(64))
    w2, b2 = lin(64, 128);  w2, b2 = _fold_bn(w2, b2, *bn(128))
    w3, b3 = lin(128, 256); w3, b3 = _fold_bn(w3, b3, *bn(256))

    # seg head
    f1, fb1 = lin(512, 256); f1, fb1 = _fold_bn(f1, fb1, *bn(256))
    f2, fb2 = lin(256, 128); f2, fb2 = _fold_bn(f2, fb2, *bn(128))
    f3, fb3 = lin(128, NUM_CLASSES)

    return {
        "w1": w1, "b1": b1, "w2": w2, "b2": b2, "w3": w3, "b3": b3,
        "f1a": f1[:256], "f1b": f1[256:], "fb1": fb1,
        "f2": f2, "fb2": fb2, "f3": f3, "fb3": fb3,
    }


def prepare_kernel_params(p):
    """Kernel-side layout: padding + bf16 matmul weights, f32 (1, C) biases."""
    def row(v):
        return v.reshape(1, -1).astype(jnp.float32)

    return {
        # layer 1 stays f32 (K padded 3 -> 8; extra rows multiply zero-padded channels)
        "w1": jnp.pad(p["w1"], ((0, PADDED_IN - 3), (0, 0))).astype(jnp.float32),
        "b1": row(p["b1"]),
        # bf16 matmul chain (f32 accumulation in-kernel)
        "w2": p["w2"].astype(jnp.bfloat16), "b2": row(p["b2"]),
        "w3": p["w3"].astype(jnp.bfloat16), "b3": row(p["b3"]),
        "f1a": p["f1a"].astype(jnp.bfloat16),
        "f1b": p["f1b"].astype(jnp.bfloat16),
        "fb1": row(p["fb1"]),
        "f2": p["f2"].astype(jnp.bfloat16), "fb2": row(p["fb2"]),
        # classes padded 7 -> 8 (zero columns) so the logits store stays narrow but valid
        "f3": jnp.pad(p["f3"], ((0, 0), (0, PADDED_CLASSES - NUM_CLASSES))).astype(jnp.bfloat16),
        "fb3": row(jnp.pad(p["fb3"], (0, PADDED_CLASSES - NUM_CLASSES))),
    }


# --------------------------------------------------------------------- references
def reference_forward_f32(x, p):
    relu = jax.nn.relu
    h = relu(x @ p["w1"] + p["b1"])
    h = relu(h @ p["w2"] + p["b2"])
    pf = relu(h @ p["w3"] + p["b3"])               # (B, N, 256)
    gf = jnp.max(pf, axis=1, keepdims=True)        # (B, 1, 256)
    h1 = relu(pf @ p["f1a"] + gf @ p["f1b"] + p["fb1"])
    h2 = relu(h1 @ p["f2"] + p["fb2"])
    return h2 @ p["f3"] + p["fb3"]                 # (B, N, 7)


def reference_forward_bf16(x, p):
    """Plain-JAX emulation of the kernel's mixed-precision scheme (tight check)."""
    relu = jax.nn.relu

    def mm(a, b):
        return jnp.dot(a.astype(jnp.bfloat16), b.astype(jnp.bfloat16),
                       preferred_element_type=jnp.float32)

    h = relu(jnp.dot(x, p["w1"], preferred_element_type=jnp.float32) + p["b1"])
    h = relu(mm(h, p["w2"]) + p["b2"])
    pf = relu(mm(h, p["w3"]) + p["b3"])
    gf = jnp.max(pf, axis=1, keepdims=True)
    h1 = relu(mm(pf, p["f1a"]) + (mm(gf, p["f1b"]) + p["fb1"]))
    h2 = relu(mm(h1, p["f2"]) + p["fb2"])
    return mm(h2, p["f3"]) + p["fb3"]


# --------------------------------------------------------------------- main
if __name__ == "__main__":
    key = jax.random.PRNGKey(0)
    k_x, k_p = jax.random.split(key)

    # small synthetic shapes (module default is NUM_POINTS=2048); TN=128 exercises the
    # two-phase fused structure with 4 tiles per batch element.
    B, N, TN = 2, 512, 128
    x = jax.random.normal(k_x, (B, N, 3), jnp.float32)
    params = init_params(k_p)
    kparams = prepare_kernel_params(params)

    run = jax.jit(functools.partial(landmark_segmentation_net, num_points=N, tile_n=TN))
    logits = jax.block_until_ready(run(x, kparams))
    assert logits.shape == (B, N, NUM_CLASSES), logits.shape

    # tight check vs. a plain-JAX emulation of the same bf16/f32 mixed-precision scheme
    ref_bf16 = reference_forward_bf16(x, params)
    err_bf16 = float(jnp.max(jnp.abs(logits - ref_bf16)))
    assert jnp.allclose(logits, ref_bf16, atol=1e-2, rtol=1e-2), err_bf16

    # loose check vs. the pure-f32 reference (bf16 matmul chain => relaxed tolerance)
    ref_f32 = reference_forward_f32(x, params)
    err_f32 = float(jnp.max(jnp.abs(logits - ref_f32)))
    assert jnp.allclose(logits, ref_f32, atol=1e-1, rtol=1e-1), err_f32

    print("KERNEL_OK")
</pallas_src>

<mosaic_0001>
module attributes {stable_mosaic.version = 11 : i64} {
  func.func @_fused_kernel(%arg0: i32, %arg1: i32, %arg2: i32, %arg3: memref<1x128x8xf32, #tpu.memory_space<vmem>>, %arg4: memref<8x64xf32, #tpu.memory_space<vmem>>, %arg5: memref<1x64xf32, #tpu.memory_space<vmem>>, %arg6: memref<64x128xbf16, #tpu.memory_space<vmem>>, %arg7: memref<1x128xf32, #tpu.memory_space<vmem>>, %arg8: memref<128x256xbf16, #tpu.memory_space<vmem>>, %arg9: memref<1x256xf32, #tpu.memory_space<vmem>>, %arg10: memref<256x256xbf16, #tpu.memory_space<vmem>>, %arg11: memref<256x256xbf16, #tpu.memory_space<vmem>>, %arg12: memref<1x256xf32, #tpu.memory_space<vmem>>, %arg13: memref<256x128xbf16, #tpu.memory_space<vmem>>, %arg14: memref<1x128xf32, #tpu.memory_space<vmem>>, %arg15: memref<128x8xbf16, #tpu.memory_space<vmem>>, %arg16: memref<1x8xf32, #tpu.memory_space<vmem>>, %arg17: memref<1x128x8xf32, #tpu.memory_space<vmem>>, %arg18: memref<4x128x256xbf16, #tpu.memory_space<vmem>>, %arg19: memref<1x256xf32, #tpu.memory_space<vmem>>, %arg20: memref<1x256xf32, #tpu.memory_space<vmem>>) attributes {dimension_semantics = [#tpu.dimension_semantics<parallel>, #tpu.dimension_semantics<arbitrary>, #tpu.dimension_semantics<arbitrary>], iteration_bounds = array<i64: 2, 2, 4>, scalar_prefetch = 0 : i64, scratch_operands = 3 : i64, tpu.core_type = #tpu.core_type<tc>, window_params = [{transform_indices = @transform_0, window_bounds = array<i64: 1, 128, 8>}, {pipeline_mode = #tpu.pipeline_mode<synchronous>, transform_indices = @transform_1, window_bounds = array<i64: 8, 64>}, {pipeline_mode = #tpu.pipeline_mode<synchronous>, transform_indices = @transform_2, window_bounds = array<i64: 1, 64>}, {pipeline_mode = #tpu.pipeline_mode<synchronous>, transform_indices = @transform_3, window_bounds = array<i64: 64, 128>}, {pipeline_mode = #tpu.pipeline_mode<synchronous>, transform_indices = @transform_4, window_bounds = array<i64: 1, 128>}, {pipeline_mode = #tpu.pipeline_mode<synchronous>, transform_indices = @transform_5, window_bounds = array<i64: 128, 256>}, {pipeline_mode = #tpu.pipeline_mode<synchronous>, transform_indices = @transform_6, window_bounds = array<i64: 1, 256>}, {pipeline_mode = #tpu.pipeline_mode<synchronous>, transform_indices = @transform_7, window_bounds = array<i64: 256, 256>}, {pipeline_mode = #tpu.pipeline_mode<synchronous>, transform_indices = @transform_8, window_bounds = array<i64: 256, 256>}, {pipeline_mode = #tpu.pipeline_mode<synchronous>, transform_indices = @transform_9, window_bounds = array<i64: 1, 256>}, {pipeline_mode = #tpu.pipeline_mode<synchronous>, transform_indices = @transform_10, window_bounds = array<i64: 256, 128>}, {pipeline_mode = #tpu.pipeline_mode<synchronous>, transform_indices = @transform_11, window_bounds = array<i64: 1, 128>}, {pipeline_mode = #tpu.pipeline_mode<synchronous>, transform_indices = @transform_12, window_bounds = array<i64: 128, 8>}, {pipeline_mode = #tpu.pipeline_mode<synchronous>, transform_indices = @transform_13, window_bounds = array<i64: 1, 8>}, {transform_indices = @transform_14, window_bounds = array<i64: 1, 128, 8>}]} {
    %c0_i32 = arith.constant 0 : i32
    %0 = arith.cmpi eq, %arg1, %c0_i32 : i32
    %1 = arith.extui %0 : i1 to i32
    %c0_i32_0 = arith.constant 0 : i32
    %2 = arith.cmpi ne, %1, %c0_i32_0 : i32
    scf.if %2 {
      %c0 = arith.constant 0 : index
      %c0_2 = arith.constant 0 : index
      %c0_3 = arith.constant 0 : index
      %6 = vector.load %arg3[%c0, %c0_2, %c0_3] : memref<1x128x8xf32, #tpu.memory_space<vmem>>, vector<1x128x8xf32>
      %7 = vector.shape_cast %6 : vector<1x128x8xf32> to vector<128x8xf32>
      %c0_4 = arith.constant 0 : index
      %c0_5 = arith.constant 0 : index
      %8 = vector.load %arg4[%c0_4, %c0_5] : memref<8x64xf32, #tpu.memory_space<vmem>>, vector<8x64xf32>
      %cst = arith.constant dense<0.000000e+00> : vector<128x64xf32>
      %9 = tpu.matmul %7, %8, %cst {dimension_numbers = #tpu.dot_dimension_numbers<[1], [0], [0], [1], [0, 0, 1, 1], [], []>} : vector<128x8xf32>, vector<8x64xf32>, vector<128x64xf32> -> vector<128x64xf32>
      %c0_6 = arith.constant 0 : index
      %c0_7 = arith.constant 0 : index
      %10 = vector.load %arg5[%c0_6, %c0_7] : memref<1x64xf32, #tpu.memory_space<vmem>>, vector<1x64xf32>
      %11 = vector.broadcast %10 : vector<1x64xf32> to vector<128x64xf32>
      %12 = arith.addf %9, %11 : vector<128x64xf32>
      %cst_8 = arith.constant 0.000000e+00 : f32
      %13 = vector.broadcast %cst_8 : f32 to vector<128x64xf32>
      %14 = arith.maximumf %12, %13 : vector<128x64xf32>
      %15 = arith.truncf %14 : vector<128x64xf32> to vector<128x64xbf16>
      %c0_9 = arith.constant 0 : index
      %c0_10 = arith.constant 0 : index
      %16 = vector.load %arg6[%c0_9, %c0_10] : memref<64x128xbf16, #tpu.memory_space<vmem>>, vector<64x128xbf16>
      %cst_11 = arith.constant dense<0.000000e+00> : vector<128x128xf32>
      %17 = tpu.matmul %15, %16, %cst_11 {dimension_numbers = #tpu.dot_dimension_numbers<[1], [0], [0], [1], [0, 0, 1, 1], [], []>} : vector<128x64xbf16>, vector<64x128xbf16>, vector<128x128xf32> -> vector<128x128xf32>
      %c0_12 = arith.constant 0 : index
      %c0_13 = arith.constant 0 : index
      %18 = vector.load %arg7[%c0_12, %c0_13] : memref<1x128xf32, #tpu.memory_space<vmem>>, vector<1x128xf32>
      %19 = vector.broadcast %18 : vector<1x128xf32> to vector<128x128xf32>
      %20 = arith.addf %17, %19 : vector<128x128xf32>
      %cst_14 = arith.constant 0.000000e+00 : f32
      %21 = vector.broadcast %cst_14 : f32 to vector<128x128xf32>
      %22 = arith.maximumf %20, %21 : vector<128x128xf32>
      %23 = arith.truncf %22 : vector<128x128xf32> to vector<128x128xbf16>
      %c0_15 = arith.constant 0 : index
      %c0_16 = arith.constant 0 : index
      %24 = vector.load %arg8[%c0_15, %c0_16] : memref<128x256xbf16, #tpu.memory_space<vmem>>, vector<128x256xbf16>
      %cst_17 = arith.constant dense<0.000000e+00> : vector<128x256xf32>
      %25 = tpu.matmul %23, %24, %cst_17 {dimension_numbers = #tpu.dot_dimension_numbers<[1], [0], [0], [1], [0, 0, 1, 1], [], []>} : vector<128x128xbf16>, vector<128x256xbf16>, vector<128x256xf32> -> vector<128x256xf32>
      %c0_18 = arith.constant 0 : index
      %c0_19 = arith.constant 0 : index
      %26 = vector.load %arg9[%c0_18, %c0_19] : memref<1x256xf32, #tpu.memory_space<vmem>>, vector<1x256xf32>
      %27 = vector.broadcast %26 : vector<1x256xf32> to vector<128x256xf32>
      %28 = arith.addf %25, %27 : vector<128x256xf32>
      %cst_20 = arith.constant 0.000000e+00 : f32
      %29 = vector.broadcast %cst_20 : f32 to vector<128x256xf32>
      %30 = arith.maximumf %28, %29 : vector<128x256xf32>
      %31 = arith.truncf %30 : vector<128x256xf32> to vector<128x256xbf16>
      %32 = arith.index_cast %arg2 : i32 to index
      %c0_21 = arith.constant 0 : index
      %c0_22 = arith.constant 0 : index
      %33 = vector.load %arg18[%32, %c0_21, %c0_22] : memref<4x128x256xbf16, #tpu.memory_space<vmem>>, vector<1x128x256xbf16>
      %34 = vector.shape_cast %33 : vector<1x128x256xbf16> to vector<128x256xbf16>
      %35 = vector.shape_cast %31 : vector<128x256xbf16> to vector<1x128x256xbf16>
      tpu.vector_store %arg18[%32, %c0_21, %c0_22], %35 {strides = array<i32>} : memref<4x128x256xbf16, #tpu.memory_space<vmem>>, vector<1x128x256xbf16>,
      %cst_23 = arith.constant dense<0xFF800000> : vector<256xf32>
      %36 = vector.multi_reduction <maximumf>, %30, %cst_23 [0] : vector<128x256xf32> to vector<256xf32>
      %37 = vector.shape_cast %36 : vector<256xf32> to vector<1x256xf32>
      %c0_i32_24 = arith.constant 0 : i32
      %38 = arith.cmpi eq, %arg2, %c0_i32_24 : i32
      %39 = arith.extui %38 : i1 to i32
      %c0_i32_25 = arith.constant 0 : i32
      %40 = arith.cmpi ne, %39, %c0_i32_25 : i32
      scf.if %40 {
        %c0_28 = arith.constant 0 : index
        %c0_29 = arith.constant 0 : index
        %44 = vector.load %arg19[%c0_28, %c0_29] : memref<1x256xf32, #tpu.memory_space<vmem>>, vector<1x256xf32>
        tpu.vector_store %arg19[%c0_28, %c0_29], %37 {strides = array<i32>} : memref<1x256xf32, #tpu.memory_space<vmem>>, vector<1x256xf32>,
      } else {
      }
      %c0_i32_26 = arith.constant 0 : i32
      %41 = arith.cmpi sgt, %arg2, %c0_i32_26 : i32
      %42 = arith.extui %41 : i1 to i32
      %c0_i32_27 = arith.constant 0 : i32
      %43 = arith.cmpi ne, %42, %c0_i32_27 : i32
      scf.if %43 {
        %c0_28 = arith.constant 0 : index
        %c0_29 = arith.constant 0 : index
        %44 = vector.load %arg19[%c0_28, %c0_29] : memref<1x256xf32, #tpu.memory_space<vmem>>, vector<1x256xf32>
        %45 = arith.maximumf %44, %37 : vector<1x256xf32>
        %c0_30 = arith.constant 0 : index
        %c0_31 = arith.constant 0 : index
        %46 = vector.load %arg19[%c0_30, %c0_31] : memref<1x256xf32, #tpu.memory_space<vmem>>, vector<1x256xf32>
        tpu.vector_store %arg19[%c0_30, %c0_31], %45 {strides = array<i32>} : memref<1x256xf32, #tpu.memory_space<vmem>>, vector<1x256xf32>,
      } else {
      }
    } else {
    }
    %c1_i32 = arith.constant 1 : i32
    %3 = arith.cmpi eq, %arg1, %c1_i32 : i32
    %4 = arith.extui %3 : i1 to i32
    %c0_i32_1 = arith.constant 0 : i32
    %5 = arith.cmpi ne, %4, %c0_i32_1 : i32
    scf.if %5 {
      %c0_i32_2 = arith.constant 0 : i32
      %6 = arith.cmpi eq, %arg2, %c0_i32_2 : i32
      %7 = arith.extui %6 : i1 to i32
      %c0_i32_3 = arith.constant 0 : i32
      %8 = arith.cmpi ne, %7, %c0_i32_3 : i32
      scf.if %8 {
        %c0_24 = arith.constant 0 : index
        %c0_25 = arith.constant 0 : index
        %36 = vector.load %arg19[%c0_24, %c0_25] : memref<1x256xf32, #tpu.memory_space<vmem>>, vector<1x256xf32>
        %37 = arith.truncf %36 : vector<1x256xf32> to vector<1x256xbf16>
        %c0_26 = arith.constant 0 : index
        %c0_27 = arith.constant 0 : index
        %38 = vector.load %arg11[%c0_26, %c0_27] : memref<256x256xbf16, #tpu.memory_space<vmem>>, vector<256x256xbf16>
        %cst_28 = arith.constant dense<0.000000e+00> : vector<1x256xf32>
        %39 = tpu.matmul %37, %38, %cst_28 {dimension_numbers = #tpu.dot_dimension_numbers<[1], [0], [0], [1], [0, 0, 1, 1], [], []>} : vector<1x256xbf16>, vector<256x256xbf16>, vector<1x256xf32> -> vector<1x256xf32>
        %c0_29 = arith.constant 0 : index
        %c0_30 = arith.constant 0 : index
        %40 = vector.load %arg12[%c0_29, %c0_30] : memref<1x256xf32, #tpu.memory_space<vmem>>, vector<1x256xf32>
        %41 = arith.addf %39, %40 : vector<1x256xf32>
        %c0_31 = arith.constant 0 : index
        %c0_32 = arith.constant 0 : index
        %42 = vector.load %arg20[%c0_31, %c0_32] : memref<1x256xf32, #tpu.memory_space<vmem>>, vector<1x256xf32>
        tpu.vector_store %arg20[%c0_31, %c0_32], %41 {strides = array<i32>} : memref<1x256xf32, #tpu.memory_space<vmem>>, vector<1x256xf32>,
      } else {
      }
      %9 = arith.index_cast %arg2 : i32 to index
      %c0 = arith.constant 0 : index
      %c0_4 = arith.constant 0 : index
      %10 = vector.load %arg18[%9, %c0, %c0_4] : memref<4x128x256xbf16, #tpu.memory_space<vmem>>, vector<1x128x256xbf16>
      %11 = vector.shape_cast %10 : vector<1x128x256xbf16> to vector<128x256xbf16>
      %c0_5 = arith.constant 0 : index
      %c0_6 = arith.constant 0 : index
      %12 = vector.load %arg10[%c0_5, %c0_6] : memref<256x256xbf16, #tpu.memory_space<vmem>>, vector<256x256xbf16>
      %cst = arith.constant dense<0.000000e+00> : vector<128x256xf32>
      %13 = tpu.matmul %11, %12, %cst {dimension_numbers = #tpu.dot_dimension_numbers<[1], [0], [0], [1], [0, 0, 1, 1], [], []>} : vector<128x256xbf16>, vector<256x256xbf16>, vector<128x256xf32> -> vector<128x256xf32>
      %c0_7 = arith.constant 0 : index
      %c0_8 = arith.constant 0 : index
      %14 = vector.load %arg20[%c0_7, %c0_8] : memref<1x256xf32, #tpu.memory_space<vmem>>, vector<1x256xf32>
      %15 = vector.broadcast %14 : vector<1x256xf32> to vector<128x256xf32>
      %16 = arith.addf %13, %15 : vector<128x256xf32>
      %cst_9 = arith.constant 0.000000e+00 : f32
      %17 = vector.broadcast %cst_9 : f32 to vector<128x256xf32>
      %18 = arith.maximumf %16, %17 : vector<128x256xf32>
      %19 = arith.truncf %18 : vector<128x256xf32> to vector<128x256xbf16>
      %c0_10 = arith.constant 0 : index
      %c0_11 = arith.constant 0 : index
      %20 = vector.load %arg13[%c0_10, %c0_11] : memref<256x128xbf16, #tpu.memory_space<vmem>>, vector<256x128xbf16>
      %cst_12 = arith.constant dense<0.000000e+00> : vector<128x128xf32>
      %21 = tpu.matmul %19, %20, %cst_12 {dimension_numbers = #tpu.dot_dimension_numbers<[1], [0], [0], [1], [0, 0, 1, 1], [], []>} : vector<128x256xbf16>, vector<256x128xbf16>, vector<128x128xf32> -> vector<128x128xf32>
      %c0_13 = arith.constant 0 : index
      %c0_14 = arith.constant 0 : index
      %22 = vector.load %arg14[%c0_13, %c0_14] : memref<1x128xf32, #tpu.memory_space<vmem>>, vector<1x128xf32>
      %23 = vector.broadcast %22 : vector<1x128xf32> to vector<128x128xf32>
      %24 = arith.addf %21, %23 : vector<128x128xf32>
      %cst_15 = arith.constant 0.000000e+00 : f32
      %25 = vector.broadcast %cst_15 : f32 to vector<128x128xf32>
      %26 = arith.maximumf %24, %25 : vector<128x128xf32>
      %27 = arith.truncf %26 : vector<128x128xf32> to vector<128x128xbf16>
      %c0_16 = arith.constant 0 : index
      %c0_17 = arith.constant 0 : index
      %28 = vector.load %arg15[%c0_16, %c0_17] : memref<128x8xbf16, #tpu.memory_space<vmem>>, vector<128x8xbf16>
      %cst_18 = arith.constant dense<0.000000e+00> : vector<128x8xf32>
      %29 = tpu.matmul %27, %28, %cst_18 {dimension_numbers = #tpu.dot_dimension_numbers<[1], [0], [0], [1], [0, 0, 1, 1], [], []>} : vector<128x128xbf16>, vector<128x8xbf16>, vector<128x8xf32> -> vector<128x8xf32>
      %c0_19 = arith.constant 0 : index
      %c0_20 = arith.constant 0 : index
      %30 = vector.load %arg16[%c0_19, %c0_20] : memref<1x8xf32, #tpu.memory_space<vmem>>, vector<1x8xf32>
      %31 = vector.broadcast %30 : vector<1x8xf32> to vector<128x8xf32>
      %32 = arith.addf %29, %31 : vector<128x8xf32>
      %c0_21 = arith.constant 0 : index
      %c0_22 = arith.constant 0 : index
      %c0_23 = arith.constant 0 : index
      %33 = vector.load %arg17[%c0_21, %c0_22, %c0_23] : memref<1x128x8xf32, #tpu.memory_space<vmem>>, vector<1x128x8xf32>
      %34 = vector.shape_cast %33 : vector<1x128x8xf32> to vector<128x8xf32>
      %35 = vector.shape_cast %32 : vector<128x8xf32> to vector<1x128x8xf32>
      tpu.vector_store %arg17[%c0_21, %c0_22, %c0_23], %35 {strides = array<i32>} : memref<1x128x8xf32, #tpu.memory_space<vmem>>, vector<1x128x8xf32>,
    } else {
    }
    return
  }
  func.func @transform_0(%arg0: i32, %arg1: i32, %arg2: i32) -> (i32, i32, i32) {
    %c1_i32 = arith.constant 1 : i32
    %0 = arith.subi %c1_i32, %arg1 : i32
    %1 = arith.muli %arg2, %0 : i32
    %c0_i32 = arith.constant 0 : i32
    %c0_i32_0 = arith.constant 0 : i32
    return %arg0, %1, %c0_i32 : i32, i32, i32
  }
  func.func @transform_1(%arg0: i32, %arg1: i32, %arg2: i32) -> (i32, i32) {
    %c0_i32 = arith.constant 0 : i32
    %c0_i32_0 = arith.constant 0 : i32
    %c0_i32_1 = arith.constant 0 : i32
    return %c0_i32, %c0_i32_0 : i32, i32
  }
  func.func @transform_2(%arg0: i32, %arg1: i32, %arg2: i32) -> (i32, i32) {
    %c0_i32 = arith.constant 0 : i32
    %c0_i32_0 = arith.constant 0 : i32
    %c0_i32_1 = arith.constant 0 : i32
    return %c0_i32, %c0_i32_0 : i32, i32
  }
  func.func @transform_3(%arg0: i32, %arg1: i32, %arg2: i32) -> (i32, i32) {
    %c0_i32 = arith.constant 0 : i32
    %c0_i32_0 = arith.constant 0 : i32
    %c0_i32_1 = arith.constant 0 : i32
    return %c0_i32, %c0_i32_0 : i32, i32
  }
  func.func @transform_4(%arg0: i32, %arg1: i32, %arg2: i32) -> (i32, i32) {
    %c0_i32 = arith.constant 0 : i32
    %c0_i32_0 = arith.constant 0 : i32
    %c0_i32_1 = arith.constant 0 : i32
    return %c0_i32, %c0_i32_0 : i32, i32
  }
  func.func @transform_5(%arg0: i32, %arg1: i32, %arg2: i32) -> (i32, i32) {
    %c0_i32 = arith.constant 0 : i32
    %c0_i32_0 = arith.constant 0 : i32
    %c0_i32_1 = arith.constant 0 : i32
    return %c0_i32, %c0_i32_0 : i32, i32
  }
  func.func @transform_6(%arg0: i32, %arg1: i32, %arg2: i32) -> (i32, i32) {
    %c0_i32 = arith.constant 0 : i32
    %c0_i32_0 = arith.constant 0 : i32
    %c0_i32_1 = arith.constant 0 : i32
    return %c0_i32, %c0_i32_0 : i32, i32
  }
  func.func @transform_7(%arg0: i32, %arg1: i32, %arg2: i32) -> (i32, i32) {
    %c0_i32 = arith.constant 0 : i32
    %c0_i32_0 = arith.constant 0 : i32
    %c0_i32_1 = arith.constant 0 : i32
    return %c0_i32, %c0_i32_0 : i32, i32
  }
  func.func @transform_8(%arg0: i32, %arg1: i32, %arg2: i32) -> (i32, i32) {
    %c0_i32 = arith.constant 0 : i32
    %c0_i32_0 = arith.constant 0 : i32
    %c0_i32_1 = arith.constant 0 : i32
    return %c0_i32, %c0_i32_0 : i32, i32
  }
  func.func @transform_9(%arg0: i32, %arg1: i32, %arg2: i32) -> (i32, i32) {
    %c0_i32 = arith.constant 0 : i32
    %c0_i32_0 = arith.constant 0 : i32
    %c0_i32_1 = arith.constant 0 : i32
    return %c0_i32, %c0_i32_0 : i32, i32
  }
  func.func @transform_10(%arg0: i32, %arg1: i32, %arg2: i32) -> (i32, i32) {
    %c0_i32 = arith.constant 0 : i32
    %c0_i32_0 = arith.constant 0 : i32
    %c0_i32_1 = arith.constant 0 : i32
    return %c0_i32, %c0_i32_0 : i32, i32
  }
  func.func @transform_11(%arg0: i32, %arg1: i32, %arg2: i32) -> (i32, i32) {
    %c0_i32 = arith.constant 0 : i32
    %c0_i32_0 = arith.constant 0 : i32
    %c0_i32_1 = arith.constant 0 : i32
    return %c0_i32, %c0_i32_0 : i32, i32
  }
  func.func @transform_12(%arg0: i32, %arg1: i32, %arg2: i32) -> (i32, i32) {
    %c0_i32 = arith.constant 0 : i32
    %c0_i32_0 = arith.constant 0 : i32
    %c0_i32_1 = arith.constant 0 : i32
    return %c0_i32, %c0_i32_0 : i32, i32
  }
  func.func @transform_13(%arg0: i32, %arg1: i32, %arg2: i32) -> (i32, i32) {
    %c0_i32 = arith.constant 0 : i32
    %c0_i32_0 = arith.constant 0 : i32
    %c0_i32_1 = arith.constant 0 : i32
    return %c0_i32, %c0_i32_0 : i32, i32
  }
  func.func @transform_14(%arg0: i32, %arg1: i32, %arg2: i32) -> (i32, i32, i32) {
    %0 = arith.muli %arg2, %arg1 : i32
    %c0_i32 = arith.constant 0 : i32
    %c0_i32_0 = arith.constant 0 : i32
    return %arg0, %0, %c0_i32 : i32, i32, i32
  }
}

</mosaic_0001>

<llo_original>
// kernel: landmark_segmentation_net.1
$region0: #{landmark_segmentation_net.1}
  #allocation0 [shape = 'u32[]', space=smem, size = 0x4, offset = 0x4, fixed_abs, tag = 'smem constant byte address 0x4 - core index']
  #allocation1 [shape = 'u32[144,128]{1,0:T(1,128)}', space=vmem, size = 0x12000, scoped, tag = 'internal scratch']
  #allocation2 [shape = 'bf16[4,128,256]{2,1,0:T(16,128)(2,1)}', space=vmem, size = 0x40000, scoped, tag = 'scratch operand']
  #allocation3 [shape = 'f32[1,256]{1,0:T(1,128)}', space=vmem, size = 0x400, scoped, tag = 'scratch operand']
  #allocation4 [shape = 'f32[1,256]{1,0:T(1,128)}', space=vmem, size = 0x400, scoped, tag = 'scratch operand']
  %s0 = inlined_call_operand.vmem [shape: f32[2,512,8], index: 0, kind: input, shape index: {}]
  %s1 = inlined_call_operand.vmem [shape: f32[8,64], index: 1, kind: input, shape index: {}]
  %s2 = inlined_call_operand.vmem [shape: f32[1,64], index: 2, kind: input, shape index: {}]
  %s3 = inlined_call_operand.vmem [shape: bf16[64,128], index: 3, kind: input, shape index: {}]
  %s4 = inlined_call_operand.vmem [shape: f32[1,128], index: 4, kind: input, shape index: {}]
  %s5 = inlined_call_operand.vmem [shape: bf16[128,256], index: 5, kind: input, shape index: {}]
  %s6 = inlined_call_operand.vmem [shape: f32[1,256], index: 6, kind: input, shape index: {}]
  %s7 = inlined_call_operand.vmem [shape: bf16[256,256], index: 7, kind: input, shape index: {}]
  %s8 = inlined_call_operand.vmem [shape: bf16[256,256], index: 8, kind: input, shape index: {}]
  %s9 = inlined_call_operand.vmem [shape: f32[1,256], index: 9, kind: input, shape index: {}]
  %s10 = inlined_call_operand.vmem [shape: bf16[256,128], index: 10, kind: input, shape index: {}]
  %s11 = inlined_call_operand.vmem [shape: f32[1,128], index: 11, kind: input, shape index: {}]
  %s12 = inlined_call_operand.vmem [shape: bf16[128,8], index: 12, kind: input, shape index: {}]
  %s13 = inlined_call_operand.vmem [shape: f32[1,8], index: 13, kind: input, shape index: {}]
  %s14 = inlined_call_operand.vmem [shape: f32[2,512,8], index: 14, kind: output, shape index: {}]
  %s15 = sld [smem:[#allocation0]]
  $region109: #{landmark_segmentation_net.1} parent=0
    _
  %s17 = ssub.s32 1, %s15
  %s18 = scalar_select 0, %s17, %s15
  loop: start=0, step=1, limit=18
  $region2: #{landmark_segmentation_net.1} parent=0 // loop_pre_header
    _
  $region3: #{landmark_segmentation_net.1} parent=0 // loop_header
    %s20 = sphi 0, %s24
    %p21 = scmp.ge.s32.totalorder %s20, 18
    %s27 = sphi 0, %s46
    %s28 = sphi 0, %s42
    %s29 = sphi 0, %s38
    %s30 = sphi 0, %s27
    %s31 = sphi 0, %s28
    %s32 = sphi 0, %s29
    %s33 = sphi 0, %s30
    %s34 = sphi 0, %s31
    %s35 = sphi 0, %s32
    %s55 = sphi 0, %s57
    %s58 = sphi 0, %s55
    %s59 = sphi 0, %s58
    %s75 = sphi 0, %s59
    %s79 = sphi 0, %s79
    %s81 = sphi 0, %s79
    %s82 = sphi 0, %s81
    %s96 = sphi 0, %s82
    %s100 = sphi 0, %s100
    %s102 = sphi 0, %s100
    %s103 = sphi 0, %s102
    %s117 = sphi 0, %s103
    %s121 = sphi 0, %s121
    %s123 = sphi 0, %s121
    %s124 = sphi 0, %s123
    %s138 = sphi 0, %s124
    %s142 = sphi 0, %s142
    %s144 = sphi 0, %s142
    %s145 = sphi 0, %s144
    %s159 = sphi 0, %s145
    %s163 = sphi 0, %s163
    %s165 = sphi 0, %s163
    %s166 = sphi 0, %s165
    %s180 = sphi 0, %s166
    %s184 = sphi 0, %s184
    %s186 = sphi 0, %s184
    %s187 = sphi 0, %s186
    %s201 = sphi 0, %s187
    %s205 = sphi 0, %s205
    %s207 = sphi 0, %s205
    %s208 = sphi 0, %s207
    %s222 = sphi 0, %s208
    %s226 = sphi 0, %s226
    %s228 = sphi 0, %s226
    %s229 = sphi 0, %s228
    %s243 = sphi 0, %s229
    %s247 = sphi 0, %s247
    %s249 = sphi 0, %s247
    %s250 = sphi 0, %s249
    %s264 = sphi 0, %s250
    %s268 = sphi 0, %s268
    %s270 = sphi 0, %s268
    %s271 = sphi 0, %s270
    %s285 = sphi 0, %s271
    %s289 = sphi 0, %s289
    %s291 = sphi 0, %s289
    %s292 = sphi 0, %s291
    %s306 = sphi 0, %s292
    %s310 = sphi 0, %s310
    %s312 = sphi 0, %s310
    %s313 = sphi 0, %s312
    %s327 = sphi 0, %s313
    %s331 = sphi 0, %s331
    %s333 = sphi 0, %s331
    %s334 = sphi 0, %s333
    %s348 = sphi 0, %s334
    %s358 = sphi 0, %s360
    %s361 = sphi 0, %s358
    %s362 = sphi 0, %s361
    %s378 = sphi 0, %s362
  $region4: #{landmark_segmentation_net.1} parent=0 // loop_header_branch
    %23 = sbr.rel (%p21) target = $region8
  $region5: #{landmark_segmentation_net.1} parent=0 // loop_body
    %s25 = ssub.s32 %s20, 1
    %s26 = ssub.s32 %s20, 2
    %s36 = sadd.s32 1, %s29
    %p37 = scmp.ge.s32.totalorder %s36, 4
    %s38 = scalar_select %p37, 0, %s36
    %s39 = sadd.s32 1, %s28
    %s40 = scalar_select %p37, %s39, %s28
    %p41 = scmp.ge.s32.totalorder %s40, 2
    %s42 = scalar_select %p41, 0, %s40
    %s43 = sadd.s32 1, %s27
    %s44 = scalar_select %p41, %s43, %s27
    %p45 = scmp.ge.s32.totalorder %s44, 2
    %s46 = scalar_select %p45, 0, %s44
    %s47 = ssub.s32 1, %s28
    %s48 = smul.u32 %s29, %s47
    %s49 = ssub.s32 1, %s42
    %s50 = smul.u32 %s38, %s49
    %s51 = ssub.s32 %s27, %s46
    %s52 = ssub.s32 %s48, %s50
    %s53 = sor.u32 %s51, %s52
    %p54 = scmp.eq.s32.totalorder %s53, 0
    %s56 = sadd.s32 %s55, 1
    %s57 = scalar_select %p54, %s55, %s56
    %p60 = pneg %p54
    %p61 = scmp.eq.s32.totalorder %s20, 15
    %p62 = por %p60, %p61
    %p63 = scmp.ne.s32.totalorder %s55, %s58
    %p64 = scmp.eq.s32.totalorder %s20, 0
    %p65 = por %p63, %p64
    %p66 = scmp.ne.s32.totalorder %s55, %s58
    %p67 = scmp.eq.s32.totalorder %s25, 15
    %p68 = por %p66, %p67
    %p69 = scmp.ne.s32.totalorder %s58, %s59
    %p70 = scmp.eq.s32.totalorder %s25, 0
    %p71 = por %p69, %p70
    %p72 = scmp.ne.s32.totalorder %s58, %s59
    %p73 = scmp.eq.s32.totalorder %s26, 15
    %p74 = por %p72, %p73
    %p76 = scmp.ne.s32.totalorder %s59, %s75
    %p77 = scmp.eq.s32.totalorder %s26, 0
    %p78 = por %p76, %p77
    %s80 = sadd.s32 %s79, 1
    %p83 = scmp.eq.s32.totalorder %s20, 15
    %p84 = scmp.ne.s32.totalorder %s79, %s81
    %p85 = scmp.eq.s32.totalorder %s20, 0
    %p86 = por %p84, %p85
    %p87 = scmp.ne.s32.totalorder %s79, %s81
    %p88 = scmp.eq.s32.totalorder %s25, 15
    %p89 = por %p87, %p88
    %p90 = scmp.ne.s32.totalorder %s81, %s82
    %p91 = scmp.eq.s32.totalorder %s25, 0
    %p92 = por %p90, %p91
    %p93 = scmp.ne.s32.totalorder %s81, %s82
    %p94 = scmp.eq.s32.totalorder %s26, 15
    %p95 = por %p93, %p94
    %p97 = scmp.ne.s32.totalorder %s82, %s96
    %p98 = scmp.eq.s32.totalorder %s26, 0
    %p99 = por %p97, %p98
    %s101 = sadd.s32 %s100, 1
    %p104 = scmp.eq.s32.totalorder %s20, 15
    %p105 = scmp.ne.s32.totalorder %s100, %s102
    %p106 = scmp.eq.s32.totalorder %s20, 0
    %p107 = por %p105, %p106
    %p108 = scmp.ne.s32.totalorder %s100, %s102
    %p109 = scmp.eq.s32.totalorder %s25, 15
    %p110 = por %p108, %p109
    %p111 = scmp.ne.s32.totalorder %s102, %s103
    %p112 = scmp.eq.s32.totalorder %s25, 0
    %p113 = por %p111, %p112
    %p114 = scmp.ne.s32.totalorder %s102, %s103
    %p115 = scmp.eq.s32.totalorder %s26, 15
    %p116 = por %p114, %p115
    %p118 = scmp.ne.s32.totalorder %s103, %s117
    %p119 = scmp.eq.s32.totalorder %s26, 0
    %p120 = por %p118, %p119
    %s122 = sadd.s32 %s121, 1
    %p125 = scmp.eq.s32.totalorder %s20, 15
    %p126 = scmp.ne.s32.totalorder %s121, %s123
    %p127 = scmp.eq.s32.totalorder %s20, 0
    %p128 = por %p126, %p127
    %p129 = scmp.ne.s32.totalorder %s121, %s123
    %p130 = scmp.eq.s32.totalorder %s25, 15
    %p131 = por %p129, %p130
    %p132 = scmp.ne.s32.totalorder %s123, %s124
    %p133 = scmp.eq.s32.totalorder %s25, 0
    %p134 = por %p132, %p133
    %p135 = scmp.ne.s32.totalorder %s123, %s124
    %p136 = scmp.eq.s32.totalorder %s26, 15
    %p137 = por %p135, %p136
    %p139 = scmp.ne.s32.totalorder %s124, %s138
    %p140 = scmp.eq.s32.totalorder %s26, 0
    %p141 = por %p139, %p140
    %s143 = sadd.s32 %s142, 1
    %p146 = scmp.eq.s32.totalorder %s20, 15
    %p147 = scmp.ne.s32.totalorder %s142, %s144
    %p148 = scmp.eq.s32.totalorder %s20, 0
    %p149 = por %p147, %p148
    %p150 = scmp.ne.s32.totalorder %s142, %s144
    %p151 = scmp.eq.s32.totalorder %s25, 15
    %p152 = por %p150, %p151
    %p153 = scmp.ne.s32.totalorder %s144, %s145
    %p154 = scmp.eq.s32.totalorder %s25, 0
    %p155 = por %p153, %p154
    %p156 = scmp.ne.s32.totalorder %s144, %s145
    %p157 = scmp.eq.s32.totalorder %s26, 15
    %p158 = por %p156, %p157
    %p160 = scmp.ne.s32.totalorder %s145, %s159
    %p161 = scmp.eq.s32.totalorder %s26, 0
    %p162 = por %p160, %p161
    %s164 = sadd.s32 %s163, 1
    %p167 = scmp.eq.s32.totalorder %s20, 15
    %p168 = scmp.ne.s32.totalorder %s163, %s165
    %p169 = scmp.eq.s32.totalorder %s20, 0
    %p170 = por %p168, %p169
    %p171 = scmp.ne.s32.totalorder %s163, %s165
    %p172 = scmp.eq.s32.totalorder %s25, 15
    %p173 = por %p171, %p172
    %p174 = scmp.ne.s32.totalorder %s165, %s166
    %p175 = scmp.eq.s32.totalorder %s25, 0
    %p176 = por %p174, %p175
    %p177 = scmp.ne.s32.totalorder %s165, %s166
    %p178 = scmp.eq.s32.totalorder %s26, 15
    %p179 = por %p177, %p178
    %p181 = scmp.ne.s32.totalorder %s166, %s180
    %p182 = scmp.eq.s32.totalorder %s26, 0
    %p183 = por %p181, %p182
    %s185 = sadd.s32 %s184, 1
    %p188 = scmp.eq.s32.totalorder %s20, 15
    %p189 = scmp.ne.s32.totalorder %s184, %s186
    %p190 = scmp.eq.s32.totalorder %s20, 0
    %p191 = por %p189, %p190
    %p192 = scmp.ne.s32.totalorder %s184, %s186
    %p193 = scmp.eq.s32.totalorder %s25, 15
    %p194 = por %p192, %p193
    %p195 = scmp.ne.s32.totalorder %s186, %s187
    %p196 = scmp.eq.s32.totalorder %s25, 0
    %p197 = por %p195, %p196
    %p198 = scmp.ne.s32.totalorder %s186, %s187
    %p199 = scmp.eq.s32.totalorder %s26, 15
    %p200 = por %p198, %p199
    %p202 = scmp.ne.s32.totalorder %s187, %s201
    %p203 = scmp.eq.s32.totalorder %s26, 0
    %p204 = por %p202, %p203
    %s206 = sadd.s32 %s205, 1
    %p209 = scmp.eq.s32.totalorder %s20, 15
    %p210 = scmp.ne.s32.totalorder %s205, %s207
    %p211 = scmp.eq.s32.totalorder %s20, 0
    %p212 = por %p210, %p211
    %p213 = scmp.ne.s32.totalorder %s205, %s207
    %p214 = scmp.eq.s32.totalorder %s25, 15
    %p215 = por %p213, %p214
    %p216 = scmp.ne.s32.totalorder %s207, %s208
    %p217 = scmp.eq.s32.totalorder %s25, 0
    %p218 = por %p216, %p217
    %p219 = scmp.ne.s32.totalorder %s207, %s208
    %p220 = scmp.eq.s32.totalorder %s26, 15
    %p221 = por %p219, %p220
    %p223 = scmp.ne.s32.totalorder %s208, %s222
    %p224 = scmp.eq.s32.totalorder %s26, 0
    %p225 = por %p223, %p224
    %s227 = sadd.s32 %s226, 1
    %p230 = scmp.eq.s32.totalorder %s20, 15
    %p231 = scmp.ne.s32.totalorder %s226, %s228
    %p232 = scmp.eq.s32.totalorder %s20, 0
    %p233 = por %p231, %p232
    %p234 = scmp.ne.s32.totalorder %s226, %s228
    %p235 = scmp.eq.s32.totalorder %s25, 15
    %p236 = por %p234, %p235
    %p237 = scmp.ne.s32.totalorder %s228, %s229
    %p238 = scmp.eq.s32.totalorder %s25, 0
    %p239 = por %p237, %p238
    %p240 = scmp.ne.s32.totalorder %s228, %s229
    %p241 = scmp.eq.s32.totalorder %s26, 15
    %p242 = por %p240, %p241
    %p244 = scmp.ne.s32.totalorder %s229, %s243
    %p245 = scmp.eq.s32.totalorder %s26, 0
    %p246 = por %p244, %p245
    %s248 = sadd.s32 %s247, 1
    %p251 = scmp.eq.s32.totalorder %s20, 15
    %p252 = scmp.ne.s32.totalorder %s247, %s249
    %p253 = scmp.eq.s32.totalorder %s20, 0
    %p254 = por %p252, %p253
    %p255 = scmp.ne.s32.totalorder %s247, %s249
    %p256 = scmp.eq.s32.totalorder %s25, 15
    %p257 = por %p255, %p256
    %p258 = scmp.ne.s32.totalorder %s249, %s250
    %p259 = scmp.eq.s32.totalorder %s25, 0
    %p260 = por %p258, %p259
    %p261 = scmp.ne.s32.totalorder %s249, %s250
    %p262 = scmp.eq.s32.totalorder %s26, 15
    %p263 = por %p261, %p262
    %p265 = scmp.ne.s32.totalorder %s250, %s264
    %p266 = scmp.eq.s32.totalorder %s26, 0
    %p267 = por %p265, %p266
    %s269 = sadd.s32 %s268, 1
    %p272 = scmp.eq.s32.totalorder %s20, 15
    %p273 = scmp.ne.s32.totalorder %s268, %s270
    %p274 = scmp.eq.s32.totalorder %s20, 0
    %p275 = por %p273, %p274
    %p276 = scmp.ne.s32.totalorder %s268, %s270
    %p277 = scmp.eq.s32.totalorder %s25, 15
    %p278 = por %p276, %p277
    %p279 = scmp.ne.s32.totalorder %s270, %s271
    %p280 = scmp.eq.s32.totalorder %s25, 0
    %p281 = por %p279, %p280
    %p282 = scmp.ne.s32.totalorder %s270, %s271
    %p283 = scmp.eq.s32.totalorder %s26, 15
    %p284 = por %p282, %p283
    %p286 = scmp.ne.s32.totalorder %s271, %s285
    %p287 = scmp.eq.s32.totalorder %s26, 0
    %p288 = por %p286, %p287
    %s290 = sadd.s32 %s289, 1
    %p293 = scmp.eq.s32.totalorder %s20, 15
    %p294 = scmp.ne.s32.totalorder %s289, %s291
    %p295 = scmp.eq.s32.totalorder %s20, 0
    %p296 = por %p294, %p295
    %p297 = scmp.ne.s32.totalorder %s289, %s291
    %p298 = scmp.eq.s32.totalorder %s25, 15
    %p299 = por %p297, %p298
    %p300 = scmp.ne.s32.totalorder %s291, %s292
    %p301 = scmp.eq.s32.totalorder %s25, 0
    %p302 = por %p300, %p301
    %p303 = scmp.ne.s32.totalorder %s291, %s292
    %p304 = scmp.eq.s32.totalorder %s26, 15
    %p305 = por %p303, %p304
    %p307 = scmp.ne.s32.totalorder %s292, %s306
    %p308 = scmp.eq.s32.totalorder %s26, 0
    %p309 = por %p307, %p308
    %s311 = sadd.s32 %s310, 1
    %p314 = scmp.eq.s32.totalorder %s20, 15
    %p315 = scmp.ne.s32.totalorder %s310, %s312
    %p316 = scmp.eq.s32.totalorder %s20, 0
    %p317 = por %p315, %p316
    %p318 = scmp.ne.s32.totalorder %s310, %s312
    %p319 = scmp.eq.s32.totalorder %s25, 15
    %p320 = por %p318, %p319
    %p321 = scmp.ne.s32.totalorder %s312, %s313
    %p322 = scmp.eq.s32.totalorder %s25, 0
    %p323 = por %p321, %p322
    %p324 = scmp.ne.s32.totalorder %s312, %s313
    %p325 = scmp.eq.s32.totalorder %s26, 15
    %p326 = por %p324, %p325
    %p328 = scmp.ne.s32.totalorder %s313, %s327
    %p329 = scmp.eq.s32.totalorder %s26, 0
    %p330 = por %p328, %p329
    %s332 = sadd.s32 %s331, 1
    %p335 = scmp.eq.s32.totalorder %s20, 15
    %p336 = scmp.ne.s32.totalorder %s331, %s333
    %p337 = scmp.eq.s32.totalorder %s20, 0
    %p338 = por %p336, %p337
    %p339 = scmp.ne.s32.totalorder %s331, %s333
    %p340 = scmp.eq.s32.totalorder %s25, 15
    %p341 = por %p339, %p340
    %p342 = scmp.ne.s32.totalorder %s333, %s334
    %p343 = scmp.eq.s32.totalorder %s25, 0
    %p344 = por %p342, %p343
    %p345 = scmp.ne.s32.totalorder %s333, %s334
    %p346 = scmp.eq.s32.totalorder %s26, 15
    %p347 = por %p345, %p346
    %p349 = scmp.ne.s32.totalorder %s334, %s348
    %p350 = scmp.eq.s32.totalorder %s26, 0
    %p351 = por %p349, %p350
    %s352 = smul.u32 %s29, %s28
    %s353 = smul.u32 %s38, %s42
    %s354 = ssub.s32 %s27, %s46
    %s355 = ssub.s32 %s352, %s353
    %s356 = sor.u32 %s354, %s355
    %p357 = scmp.eq.s32.totalorder %s356, 0
    %s359 = sadd.s32 %s358, 1
    %s360 = scalar_select %p357, %s358, %s359
    %p363 = pneg %p357
    %p364 = scmp.eq.s32.totalorder %s20, 15
    %p365 = por %p363, %p364
    %p366 = scmp.ne.s32.totalorder %s358, %s361
    %p367 = scmp.eq.s32.totalorder %s20, 0
    %p368 = por %p366, %p367
    %p369 = scmp.ne.s32.totalorder %s358, %s361
    %p370 = scmp.eq.s32.totalorder %s25, 15
    %p371 = por %p369, %p370
    %p372 = scmp.ne.s32.totalorder %s361, %s362
    %p373 = scmp.eq.s32.totalorder %s25, 0
    %p374 = por %p372, %p373
    %p375 = scmp.ne.s32.totalorder %s361, %s362
    %p376 = scmp.eq.s32.totalorder %s26, 15
    %p377 = por %p375, %p376
    %p379 = scmp.ne.s32.totalorder %s362, %s378
    %p380 = scmp.eq.s32.totalorder %s26, 0
    %p381 = por %p379, %p380
    %p382 = scmp.le.s32.totalorder 1, %s20
    %p383 = scmp.lt.s32.totalorder %s20, 17
    %p384 = pnand %p382, %p383
    %p385 = pneg %p384
    // Predicated region
    $region9: #{landmark_segmentation_net.1} parent=5 // pred_check
      _
    $region10: #{landmark_segmentation_net.1} parent=5 // pred_check_branch
      %387 = sbr.rel (%p384) target = $region12
    $region11: #{landmark_segmentation_net.1} parent=5 // pred_region
      %s388 = ssub.s32 %s20, 1
      // Predicated region
      $region13: #{landmark_segmentation_net.1} parent=11 // pred_check
        %p389 = pneg %p92
      $region14: #{landmark_segmentation_net.1} parent=11 // pred_check_branch
        %391 = sbr.rel (%p389) target = $region16
      $region15: #{landmark_segmentation_net.1} parent=11 // pred_region
        _
      $region16: #{landmark_segmentation_net.1} parent=11 // pred_fallthru
        _
      // Predicated region
      $region17: #{landmark_segmentation_net.1} parent=11 // pred_check
        %p392 = pneg %p113
      $region18: #{landmark_segmentation_net.1} parent=11 // pred_check_branch
        %394 = sbr.rel (%p392) target = $region20
      $region19: #{landmark_segmentation_net.1} parent=11 // pred_region
        _
      $region20: #{landmark_segmentation_net.1} parent=11 // pred_fallthru
        _
      // Predicated region
      $region21: #{landmark_segmentation_net.1} parent=11 // pred_check
        %p395 = pneg %p134
      $region22: #{landmark_segmentation_net.1} parent=11 // pred_check_branch
        %397 = sbr.rel (%p395) target = $region24
      $region23: #{landmark_segmentation_net.1} parent=11 // pred_region
        _
      $region24: #{landmark_segmentation_net.1} parent=11 // pred_fallthru
        _
      // Predicated region
      $region25: #{landmark_segmentation_net.1} parent=11 // pred_check
        %p398 = pneg %p155
      $region26: #{landmark_segmentation_net.1} parent=11 // pred_check_branch
        %400 = sbr.rel (%p398) target = $region28
      $region27: #{landmark_segmentation_net.1} parent=11 // pred_region
        _
      $region28: #{landmark_segmentation_net.1} parent=11 // pred_fallthru
        _
      // Predicated region
      $region29: #{landmark_segmentation_net.1} parent=11 // pred_check
        %p401 = pneg %p176
      $region30: #{landmark_segmentation_net.1} parent=11 // pred_check_branch
        %403 = sbr.rel (%p401) target = $region32
      $region31: #{landmark_segmentation_net.1} parent=11 // pred_region
        _
      $region32: #{landmark_segmentation_net.1} parent=11 // pred_fallthru
        _
      // Predicated region
      $region33: #{landmark_segmentation_net.1} parent=11 // pred_check
        %p404 = pneg %p197
      $region34: #{landmark_segmentation_net.1} parent=11 // pred_check_branch
        %406 = sbr.rel (%p404) target = $region36
      $region35: #{landmark_segmentation_net.1} parent=11 // pred_region
        _
      $region36: #{landmark_segmentation_net.1} parent=11 // pred_fallthru
        _
      // Predicated region
      $region37: #{landmark_segmentation_net.1} parent=11 // pred_check
        %p407 = pneg %p218
      $region38: #{landmark_segmentation_net.1} parent=11 // pred_check_branch
        %409 = sbr.rel (%p407) target = $region40
      $region39: #{landmark_segmentation_net.1} parent=11 // pred_region
        _
      $region40: #{landmark_segmentation_net.1} parent=11 // pred_fallthru
        _
      // Predicated region
      $region41: #{landmark_segmentation_net.1} parent=11 // pred_check
        %p410 = pneg %p239
      $region42: #{landmark_segmentation_net.1} parent=11 // pred_check_branch
        %412 = sbr.rel (%p410) target = $region44
      $region43: #{landmark_segmentation_net.1} parent=11 // pred_region
        _
      $region44: #{landmark_segmentation_net.1} parent=11 // pred_fallthru
        _
      // Predicated region
      $region45: #{landmark_segmentation_net.1} parent=11 // pred_check
        %p413 = pneg %p260
      $region46: #{landmark_segmentation_net.1} parent=11 // pred_check_branch
        %415 = sbr.rel (%p413) target = $region48
      $region47: #{landmark_segmentation_net.1} parent=11 // pred_region
        _
      $region48: #{landmark_segmentation_net.1} parent=11 // pred_fallthru
        _
      // Predicated region
      $region49: #{landmark_segmentation_net.1} parent=11 // pred_check
        %p416 = pneg %p281
      $region50: #{landmark_segmentation_net.1} parent=11 // pred_check_branch
        %418 = sbr.rel (%p416) target = $region52
      $region51: #{landmark_segmentation_net.1} parent=11 // pred_region
        _
      $region52: #{landmark_segmentation_net.1} parent=11 // pred_fallthru
        _
      // Predicated region
      $region53: #{landmark_segmentation_net.1} parent=11 // pred_check
        %p419 = pneg %p302
      $region54: #{landmark_segmentation_net.1} parent=11 // pred_check_branch
        %421 = sbr.rel (%p419) target = $region56
      $region55: #{landmark_segmentation_net.1} parent=11 // pred_region
        _
      $region56: #{landmark_segmentation_net.1} parent=11 // pred_fallthru
        _
      // Predicated region
      $region57: #{landmark_segmentation_net.1} parent=11 // pred_check
        %p422 = pneg %p323
      $region58: #{landmark_segmentation_net.1} parent=11 // pred_check_branch
        %424 = sbr.rel (%p422) target = $region60
      $region59: #{landmark_segmentation_net.1} parent=11 // pred_region
        _
      $region60: #{landmark_segmentation_net.1} parent=11 // pred_fallthru
        _
      // Predicated region
      $region61: #{landmark_segmentation_net.1} parent=11 // pred_check
        %p425 = pneg %p344
      $region62: #{landmark_segmentation_net.1} parent=11 // pred_check_branch
        %427 = sbr.rel (%p425) target = $region64
      $region63: #{landmark_segmentation_net.1} parent=11 // pred_region
        _
      $region64: #{landmark_segmentation_net.1} parent=11 // pred_fallthru
        _
    $region12: #{landmark_segmentation_net.1} parent=5 // pred_fallthru
      _
    %p428 = scmp.lt.s32.totalorder %s20, 16
    // Predicated region
    $region65: #{landmark_segmentation_net.1} parent=5 // pred_check
      %p429 = pneg %p428
    $region66: #{landmark_segmentation_net.1} parent=5 // pred_check_branch
      %431 = sbr.rel (%p429) target = $region68
    $region67: #{landmark_segmentation_net.1} parent=5 // pred_region
      // Predicated region
      $region69: #{landmark_segmentation_net.1} parent=67 // pred_check
        %p432 = pneg %p65
      $region70: #{landmark_segmentation_net.1} parent=67 // pred_check_branch
        %434 = sbr.rel (%p432) target = $region72
      $region71: #{landmark_segmentation_net.1} parent=67 // pred_region
        %s435 = ssub.s32 1, %s28
        %s436 = smul.u32 %s29, %s435
        %s437 = smul.u32 16, %s436
        %p438 = scmp.lt.s32.totalorder %s27, 1
        %s439 = scalar_select %p438, %s27, 1
        %p440 = scmp.lt.s32.totalorder %s437, 63
        %s441 = scalar_select %p440, %s437, 63
        %s442 = smul.addr %s439, 64
        %s443 = sadd.s32 %s441, %s442
        %s444 = smul.addr %s443, 8
        %s445 = scalar_lea.vmem %s0, %s444
        %s446 = ssub.s32 1, %s28
        %s447 = smul.u32 %s29, %s446
        %s448 = smul.u32 16, %s447
      $region72: #{landmark_segmentation_net.1} parent=67 // pred_fallthru
        _
    $region68: #{landmark_segmentation_net.1} parent=5 // pred_fallthru
      _
    %p449 = scmp.le.s32.totalorder 1, %s20
    %p450 = scmp.lt.s32.totalorder %s20, 17
    %p451 = pnand %p449, %p450
    %p452 = pneg %p451
    // Predicated region
    $region73: #{landmark_segmentation_net.1} parent=5 // pred_check
      _
    $region74: #{landmark_segmentation_net.1} parent=5 // pred_check_branch
      %454 = sbr.rel (%p451) target = $region76
    $region75: #{landmark_segmentation_net.1} parent=5 // pred_region
      %s455 = ssub.s32 %s20, 1
      %s456 = ssub.s32 1, %s31
      %s457 = smul.u32 %s32, %s456
      %s458 = smul.u32 16, %s457
      %p459 = scmp.lt.s32.totalorder %s30, 1
      %s460 = scalar_select %p459, %s30, 1
      %p461 = scmp.lt.s32.totalorder %s458, 63
      %s462 = scalar_select %p461, %s458, 63
      %s463 = smul.addr %s460, 64
      %s464 = sadd.s32 %s462, %s463
      %s465 = smul.addr %s464, 8
      %s466 = scalar_lea.vmem %s0, %s465
      %p467 = pneg %p71
      %p468 = pneg %p68
      %p469 = pneg %p92
      %p470 = pneg %p89
      %p471 = pneg %p113
      %p472 = pneg %p110
      %p473 = pneg %p134
      %p474 = pneg %p131
      %p475 = pneg %p155
      %p476 = pneg %p152
      %p477 = pneg %p176
      %p478 = pneg %p173
      %p479 = pneg %p197
      %p480 = pneg %p194
      %p481 = pneg %p218
      %p482 = pneg %p215
      %p483 = pneg %p239
      %p484 = pneg %p236
      %p485 = pneg %p260
      %p486 = pneg %p257
      %p487 = pneg %p281
      %p488 = pneg %p278
      %p489 = pneg %p302
      %p490 = pneg %p299
      %p491 = pneg %p323
      %p492 = pneg %p320
      %p493 = pneg %p344
      %p494 = pneg %p341
      %p495 = pneg %p374
      %p496 = pneg %p371
      %s497 = smul.u32 %s32, %s31
      %s498 = smul.u32 16, %s497
      %p499 = scmp.lt.s32.totalorder %s30, 1
      %s500 = scalar_select %p499, %s30, 1
      %p501 = scmp.lt.s32.totalorder %s498, 63
      %s502 = scalar_select %p501, %s498, 63
      %s503 = smul.addr %s500, 64
      %s504 = sadd.s32 %s502, %s503
      %s505 = smul.addr %s504, 8
      %s506 = scalar_lea.vmem %s14, %s505
      %s507 = ssub.s32 1, %s31
      %s508 = smul.u32 %s32, %s507
      %s509 = smul.u32 16, %s508
      %p510 = scmp.lt.s32.totalorder %s30, 1
      %s511 = scalar_select %p510, %s30, 1
      %p512 = scmp.lt.s32.totalorder %s509, 63
      %s513 = scalar_select %p512, %s509, 63
      %s514 = smul.addr %s511, 64
      %s515 = sadd.s32 %s513, %s514
      %s516 = smul.addr %s515, 8
      %s517 = scalar_lea.vmem %s0, %s516
      %s518 = ssub.s32 1, %s31
      %s519 = smul.u32 %s32, %s518
      %s520 = smul.u32 16, %s519
      %s521 = smul.u32 %s32, %s31
      %s522 = smul.u32 16, %s521
      %p523 = scmp.lt.s32.totalorder %s30, 1
      %s524 = scalar_select %p523, %s30, 1
      %p525 = scmp.lt.s32.totalorder %s522, 63
      %s526 = scalar_select %p525, %s522, 63
      %s527 = smul.addr %s524, 64
      %s528 = sadd.s32 %s526, %s527
      %s529 = smul.addr %s528, 8
      %s530 = scalar_lea.vmem %s14, %s529
      %s531 = smul.u32 %s32, %s31
      %s532 = smul.u32 16, %s531
      %p534 = scmp.eq.s32.totalorder %s31, 0
      // Predicated region
      $region77: #{landmark_segmentation_net.1} parent=75 // pred_check
        %p535 = pneg %p534
      $region78: #{landmark_segmentation_net.1} parent=75 // pred_check_branch
        %537 = sbr.rel (%p535) target = $region80
      $region79: #{landmark_segmentation_net.1} parent=75 // pred_region
        %v538 = vld [vmem:[%s517] sm:$0xff]
        %v539 = vld [vmem:[%s517 + $0x8] sm:$0xff]
        %v540 = vld [vmem:[%s517 + $0x10] sm:$0xff]
        %v541 = vld [vmem:[%s517 + $0x18] sm:$0xff]
        %v542 = vld [vmem:[%s517 + $0x20] sm:$0xff]
        %v543 = vld [vmem:[%s517 + $0x28] sm:$0xff]
        %v544 = vld [vmem:[%s517 + $0x30] sm:$0xff]
        %v545 = vld [vmem:[%s517 + $0x38] sm:$0xff]
        %v546 = vld [vmem:[%s517 + $0x40] sm:$0xff]
        %v547 = vld [vmem:[%s517 + $0x48] sm:$0xff]
        %v548 = vld [vmem:[%s517 + $0x50] sm:$0xff]
        %v549 = vld [vmem:[%s517 + $0x58] sm:$0xff]
        %v550 = vld [vmem:[%s517 + $0x60] sm:$0xff]
        %v551 = vld [vmem:[%s517 + $0x68] sm:$0xff]
        %v552 = vld [vmem:[%s517 + $0x70] sm:$0xff]
        %v553 = vld [vmem:[%s517 + $0x78] sm:$0xff]
        %v554 = vld [vmem:[%s1] sm:$0xff]
        %v555 = vld [vmem:[%s2] sm:$0x1]
        %v557 = vlaneseq
        %v558 = vshrl.u32 %v557, 7
        %v559 = vsub.s32 0, %v558
        %v560 = vrot.slane %v555, %v559
        %vm562 = vcmask 64512
        %v564 = vsel %vm562, %v538, 0
        %v567 = vsel %vm562, %v539, 0
        %v570 = vsel %vm562, %v540, 0
        %v573 = vsel %vm562, %v541, 0
        %v576 = vsel %vm562, %v542, 0
        %v579 = vsel %vm562, %v543, 0
        %v582 = vsel %vm562, %v544, 0
        %v585 = vsel %vm562, %v545, 0
        %v588 = vsel %vm562, %v546, 0
        %v591 = vsel %vm562, %v547, 0
        %v594 = vsel %vm562, %v548, 0
        %v597 = vsel %vm562, %v549, 0
        %v600 = vsel %vm562, %v550, 0
        %v603 = vsel %vm562, %v551, 0
        %v606 = vsel %vm562, %v552, 0
        %v609 = vsel %vm562, %v553, 0
        %611 = vmatprep.subr.mxu0 0.0
        %612 = vmatpush1.msra.mxu0 %v554
        %613 = vmatprep.subr.mxu0 0.0
        %614 = vmatpush1.msra.mxu0 0.0
        %615 = vmatprep.subr.mxu0 0.0
        %616 = vmatpush1.msra.mxu0 0.0
        %617 = vmatprep.subr.mxu0 0.0
        %618 = vmatpush1.msra.mxu0 0.0
        %619 = vmatprep.subr.mxu0 0.0
        %620 = vmatpush1.msra.mxu0 0.0
        %621 = vmatprep.subr.mxu0 0.0
        %622 = vmatpush1.msra.mxu0 0.0
        %623 = vmatprep.subr.mxu0 0.0
        %624 = vmatpush1.msra.mxu0 0.0
        %625 = vmatprep.subr.mxu0 0.0
        %626 = vmatpush1.msra.mxu0 0.0
        %627 = vmatprep.subr.mxu0 0.0
        %628 = vmatpush1.msra.mxu0 0.0
        %629 = vmatprep.subr.mxu0 0.0
        %630 = vmatpush1.msra.mxu0 0.0
        %631 = vmatprep.subr.mxu0 0.0
        %632 = vmatpush1.msra.mxu0 0.0
        %633 = vmatprep.subr.mxu0 0.0
        %634 = vmatpush1.msra.mxu0 0.0
        %635 = vmatprep.subr.mxu0 0.0
        %636 = vmatpush1.msra.mxu0 0.0
        %637 = vmatprep.subr.mxu0 0.0
        %638 = vmatpush1.msra.mxu0 0.0
        %639 = vmatprep.subr.mxu0 0.0
        %640 = vmatpush1.msra.mxu0 0.0
        %641 = vmatprep.subr.mxu0 0.0
        %642 = vmatpush1.msra.mxu0 0.0
        %643 = vmatprep.subr.mxu0 0.0
        %644 = vmatpush1.msra.mxu0 0.0
        %645 = vmatprep.subr.mxu0 0.0
        %646 = vmatpush1.msra.mxu0 0.0
        %647 = vmatprep.subr.mxu0 0.0
        %648 = vmatpush1.msra.mxu0 0.0
        %649 = vmatprep.subr.mxu0 0.0
        %650 = vmatpush1.msra.mxu0 0.0
        %651 = vmatprep.subr.mxu0 0.0
        %652 = vmatpush1.msra.mxu0 0.0
        %653 = vmatprep.subr.mxu0 0.0
        %654 = vmatpush1.msra.mxu0 0.0
        %655 = vmatprep.subr.mxu0 0.0
        %656 = vmatpush1.msra.mxu0 0.0
        %657 = vmatprep.subr.mxu0 0.0
        %658 = vmatpush1.msra.mxu0 0.0
        %659 = vmatprep.subr.mxu0 0.0
        %660 = vmatpush1.msra.mxu0 0.0
        %661 = vmatprep.subr.mxu0 0.0
        %662 = vmatpush1.msra.mxu0 0.0
        %663 = vmatprep.subr.mxu0 0.0
        %664 = vmatpush1.msra.mxu0 0.0
        %665 = vmatprep.subr.mxu0 0.0
        %666 = vmatpush1.msra.mxu0 0.0
        %667 = vmatprep.subr.mxu0 0.0
        %668 = vmatpush1.msra.mxu0 0.0
        %669 = vmatprep.subr.mxu0 0.0
        %670 = vmatpush1.msra.mxu0 0.0
        %671 = vmatprep.subr.mxu0 0.0
        %672 = vmatpush1.msra.mxu0 0.0
        %673 = vmatprep.subr.mxu0 0.0
        %674 = vmatpush1.msra.mxu0 0.0
        %675 = vmatprep.mubr.f32.mxu0 0.0
        %676 = vmatmul.mubr.f32.gmra.mrb[0].mxu0 %v564
        %v677 = vpop.f32.mrb[0].mxu0
        %v678 = vadd.f32 %v560, %v677
        %v679 = vpop.f32.mrb[0].mxu0
        %680 = vmatprep.mubr.f32.mxu0 0.0
        %681 = vmatmul.mubr.f32.gmra.mrb[0].mxu0 %v567
        %v682 = vpop.f32.mrb[0].mxu0
        %v683 = vadd.f32 %v560, %v682
        %v684 = vpop.f32.mrb[0].mxu0
        %685 = vmatprep.mubr.f32.mxu0 0.0
        %686 = vmatmul.mubr.f32.gmra.mrb[0].mxu0 %v570
        %v687 = vpop.f32.mrb[0].mxu0
        %v688 = vadd.f32 %v560, %v687
        %v689 = vpop.f32.mrb[0].mxu0
        %690 = vmatprep.mubr.f32.mxu0 0.0
        %691 = vmatmul.mubr.f32.gmra.mrb[0].mxu0 %v573
        %v692 = vpop.f32.mrb[0].mxu0
        %v693 = vadd.f32 %v560, %v692
        %v694 = vpop.f32.mrb[0].mxu0
        %695 = vmatprep.mubr.f32.mxu0 0.0
        %696 = vmatmul.mubr.f32.gmra.mrb[0].mxu0 %v576
        %v697 = vpop.f32.mrb[0].mxu0
        %v698 = vadd.f32 %v560, %v697
        %v699 = vpop.f32.mrb[0].mxu0
        %700 = vmatprep.mubr.f32.mxu0 0.0
        %701 = vmatmul.mubr.f32.gmra.mrb[0].mxu0 %v579
        %v702 = vpop.f32.mrb[0].mxu0
        %v703 = vadd.f32 %v560, %v702
        %v704 = vpop.f32.mrb[0].mxu0
        %705 = vmatprep.mubr.f32.mxu0 0.0
        %706 = vmatmul.mubr.f32.gmra.mrb[0].mxu0 %v582
        %v707 = vpop.f32.mrb[0].mxu0
        %v708 = vadd.f32 %v560, %v707
        %v709 = vpop.f32.mrb[0].mxu0
        %710 = vmatprep.mubr.f32.mxu0 0.0
        %711 = vmatmul.mubr.f32.gmra.mrb[0].mxu0 %v585
        %v712 = vpop.f32.mrb[0].mxu0
        %v713 = vadd.f32 %v560, %v712
        %v714 = vpop.f32.mrb[0].mxu0
        %715 = vmatprep.mubr.f32.mxu0 0.0
        %716 = vmatmul.mubr.f32.gmra.mrb[0].mxu0 %v588
        %v717 = vpop.f32.mrb[0].mxu0
        %v718 = vadd.f32 %v560, %v717
        %v719 = vpop.f32.mrb[0].mxu0
        %720 = vmatprep.mubr.f32.mxu0 0.0
        %721 = vmatmul.mubr.f32.gmra.mrb[0].mxu0 %v591
        %v722 = vpop.f32.mrb[0].mxu0
        %v723 = vadd.f32 %v560, %v722
        %v724 = vpop.f32.mrb[0].mxu0
        %725 = vmatprep.mubr.f32.mxu0 0.0
        %726 = vmatmul.mubr.f32.gmra.mrb[0].mxu0 %v594
        %v727 = vpop.f32.mrb[0].mxu0
        %v728 = vadd.f32 %v560, %v727
        %v729 = vpop.f32.mrb[0].mxu0
        %730 = vmatprep.mubr.f32.mxu0 0.0
        %731 = vmatmul.mubr.f32.gmra.mrb[0].mxu0 %v597
        %v732 = vpop.f32.mrb[0].mxu0
        %v733 = vadd.f32 %v560, %v732
        %v734 = vpop.f32.mrb[0].mxu0
        %735 = vmatprep.mubr.f32.mxu0 0.0
        %736 = vmatmul.mubr.f32.gmra.mrb[0].mxu0 %v600
        %v737 = vpop.f32.mrb[0].mxu0
        %v738 = vadd.f32 %v560, %v737
        %v739 = vpop.f32.mrb[0].mxu0
        %740 = vmatprep.mubr.f32.mxu0 0.0
        %741 = vmatmul.mubr.f32.gmra.mrb[0].mxu0 %v603
        %v742 = vpop.f32.mrb[0].mxu0
        %v743 = vadd.f32 %v560, %v742
        %v744 = vpop.f32.mrb[0].mxu0
        %745 = vmatprep.mubr.f32.mxu0 0.0
        %746 = vmatmul.mubr.f32.gmra.mrb[0].mxu0 %v606
        %v747 = vpop.f32.mrb[0].mxu0
        %v748 = vadd.f32 %v560, %v747
        %v749 = vpop.f32.mrb[0].mxu0
        %750 = vmatprep.mubr.f32.mxu0 0.0
        %751 = vmatmul.mubr.f32.gmra.mrb[0].mxu0 %v609
        %v752 = vpop.f32.mrb[0].mxu0
        %v753 = vadd.f32 %v560, %v752
        %v754 = vpop.f32.mrb[0].mxu0
        %755 = vdwg.mxu0
        %v756 = vmax.f32 %v678, 0.0
        %v757 = vmax.f32 %v683, 0.0
        %v758 = vmax.f32 %v688, 0.0
        %v759 = vmax.f32 %v693, 0.0
        %v760 = vmax.f32 %v698, 0.0
        %v761 = vmax.f32 %v703, 0.0
        %v762 = vmax.f32 %v708, 0.0
        %v763 = vmax.f32 %v713, 0.0
        %v764 = vmax.f32 %v718, 0.0
        %v765 = vmax.f32 %v723, 0.0
        %v766 = vmax.f32 %v728, 0.0
        %v767 = vmax.f32 %v733, 0.0
        %v768 = vmax.f32 %v738, 0.0
        %v769 = vmax.f32 %v743, 0.0
        %v770 = vmax.f32 %v748, 0.0
        %v771 = vmax.f32 %v753, 0.0
        %v772 = vpack.c.bf16 %v757, %v756
        %v773 = vpack.c.bf16 %v759, %v758
        %v774 = vpack.c.bf16 %v761, %v760
        %v775 = vpack.c.bf16 %v763, %v762
        %v776 = vpack.c.bf16 %v765, %v764
        %v777 = vpack.c.bf16 %v767, %v766
        %v778 = vpack.c.bf16 %v769, %v768
        %v779 = vpack.c.bf16 %v771, %v770
        %v780 = vld [vmem:[%s3] sm:$0xf]
        %v781 = vld [vmem:[%s3 + $0x4] sm:$0xf]
        %v782 = vld [vmem:[%s3 + $0x8] sm:$0xf]
        %v783 = vld [vmem:[%s3 + $0xc] sm:$0xf]
        %v784 = vld [vmem:[%s3 + $0x10] sm:$0xf]
        %v785 = vld [vmem:[%s3 + $0x14] sm:$0xf]
        %v786 = vld [vmem:[%s3 + $0x18] sm:$0xf]
        %v787 = vld [vmem:[%s3 + $0x1c] sm:$0xf]
        %v788 = vld [vmem:[%s4] sm:$0x1]
        %v790 = vlaneseq
        %v791 = vshrl.u32 %v790, 7
        %v792 = vsub.s32 0, %v791
        %v793 = vrot.slane %v788, %v792
        %v803 = vunpack.c.l.b16 %v780
        %v804 = vunpack.c.l.b16 %v781
        %v805 = vunpack.c.l.b16 %v782
        %v806 = vunpack.c.l.b16 %v783
        %v807 = vunpack.c.l.b16 %v784
        %v808 = vunpack.c.l.b16 %v785
        %v809 = vunpack.c.l.b16 %v786
        %v810 = vunpack.c.l.b16 %v787
        %v811 = vpack.c.b16 %v804, %v803
        %v812 = vpack.c.b16 %v806, %v805
        %v813 = vpack.c.b16 %v808, %v807
        %v814 = vpack.c.b16 %v810, %v809
        %vm819 = vcmask 523264
        %v821 = vsel %vm819, %v772, 0
        %v824 = vsel %vm819, %v773, 0
        %v827 = vsel %vm819, %v774, 0
        %v830 = vsel %vm819, %v775, 0
        %v833 = vsel %vm819, %v776, 0
        %v836 = vsel %vm819, %v777, 0
        %v839 = vsel %vm819, %v778, 0
        %v842 = vsel %vm819, %v779, 0
        %844 = vmatprep.subr.bf16.mxu0 0
        %845 = vmatpush1.bf16.msra.mxu0 %v811
        %846 = vmatprep.subr.bf16.mxu0 0
        %847 = vmatpush1.bf16.msra.mxu0 %v812
        %848 = vmatprep.subr.bf16.mxu0 0
        %849 = vmatpush1.bf16.msra.mxu0 %v813
        %850 = vmatprep.subr.bf16.mxu0 0
        %851 = vmatpush1.bf16.msra.mxu0 %v814
        %852 = vmatprep.subr.bf16.mxu0 0
        %853 = vmatpush1.bf16.msra.mxu0 0
        %854 = vmatprep.subr.bf16.mxu0 0
        %855 = vmatpush1.bf16.msra.mxu0 0
        %856 = vmatprep.subr.bf16.mxu0 0
        %857 = vmatpush1.bf16.msra.mxu0 0
        %858 = vmatprep.subr.bf16.mxu0 0
        %859 = vmatpush1.bf16.msra.mxu0 0
        %860 = vmatprep.subr.bf16.mxu0 0
        %861 = vmatpush1.bf16.msra.mxu0 0
        %862 = vmatprep.subr.bf16.mxu0 0
        %863 = vmatpush1.bf16.msra.mxu0 0
        %864 = vmatprep.subr.bf16.mxu0 0
        %865 = vmatpush1.bf16.msra.mxu0 0
        %866 = vmatprep.subr.bf16.mxu0 0
        %867 = vmatpush1.bf16.msra.mxu0 0
        %868 = vmatprep.subr.bf16.mxu0 0
        %869 = vmatpush1.bf16.msra.mxu0 0
        %870 = vmatprep.subr.bf16.mxu0 0
        %871 = vmatpush1.bf16.msra.mxu0 0
        %872 = vmatprep.subr.bf16.mxu0 0
        %873 = vmatpush1.bf16.msra.mxu0 0
        %874 = vmatprep.subr.bf16.mxu0 0
        %875 = vmatpush1.bf16.msra.mxu0 0
        %876 = vmatprep.mubr.bf16.mxu0 0
        %877 = vmatmul.mubr.bf16.gmra.mrb[0].mxu0 %v821
        %v878 = vpop.f32.mrb[0].mxu0
        %v879 = vadd.f32 %v793, %v878
        %v880 = vpop.f32.mrb[0].mxu0
        %v881 = vpop.f32.mrb[0].mxu0
        %v882 = vadd.f32 %v793, %v881
        %v883 = vpop.f32.mrb[0].mxu0
        %884 = vmatprep.mubr.bf16.mxu0 0
        %885 = vmatmul.mubr.bf16.gmra.mrb[0].mxu0 %v824
        %v886 = vpop.f32.mrb[0].mxu0
        %v887 = vadd.f32 %v793, %v886
        %v888 = vpop.f32.mrb[0].mxu0
        %v889 = vpop.f32.mrb[0].mxu0
        %v890 = vadd.f32 %v793, %v889
        %v891 = vpop.f32.mrb[0].mxu0
        %892 = vmatprep.mubr.bf16.mxu0 0
        %893 = vmatmul.mubr.bf16.gmra.mrb[0].mxu0 %v827
        %v894 = vpop.f32.mrb[0].mxu0
        %v895 = vadd.f32 %v793, %v894
        %v896 = vpop.f32.mrb[0].mxu0
        %v897 = vpop.f32.mrb[0].mxu0
        %v898 = vadd.f32 %v793, %v897
        %v899 = vpop.f32.mrb[0].mxu0
        %900 = vmatprep.mubr.bf16.mxu0 0
        %901 = vmatmul.mubr.bf16.gmra.mrb[0].mxu0 %v830
        %v902 = vpop.f32.mrb[0].mxu0
        %v903 = vadd.f32 %v793, %v902
        %v904 = vpop.f32.mrb[0].mxu0
        %v905 = vpop.f32.mrb[0].mxu0
        %v906 = vadd.f32 %v793, %v905
        %v907 = vpop.f32.mrb[0].mxu0
        %908 = vmatprep.mubr.bf16.mxu0 0
        %909 = vmatmul.mubr.bf16.gmra.mrb[0].mxu0 %v833
        %v910 = vpop.f32.mrb[0].mxu0
        %v911 = vadd.f32 %v793, %v910
        %v912 = vpop.f32.mrb[0].mxu0
        %v913 = vpop.f32.mrb[0].mxu0
        %v914 = vadd.f32 %v793, %v913
        %v915 = vpop.f32.mrb[0].mxu0
        %916 = vmatprep.mubr.bf16.mxu0 0
        %917 = vmatmul.mubr.bf16.gmra.mrb[0].mxu0 %v836
        %v918 = vpop.f32.mrb[0].mxu0
        %v919 = vadd.f32 %v793, %v918
        %v920 = vpop.f32.mrb[0].mxu0
        %v921 = vpop.f32.mrb[0].mxu0
        %v922 = vadd.f32 %v793, %v921
        %v923 = vpop.f32.mrb[0].mxu0
        %924 = vmatprep.mubr.bf16.mxu0 0
        %925 = vmatmul.mubr.bf16.gmra.mrb[0].mxu0 %v839
        %v926 = vpop.f32.mrb[0].mxu0
        %v927 = vadd.f32 %v793, %v926
        %v928 = vpop.f32.mrb[0].mxu0
        %v929 = vpop.f32.mrb[0].mxu0
        %v930 = vadd.f32 %v793, %v929
        %v931 = vpop.f32.mrb[0].mxu0
        %932 = vmatprep.mubr.bf16.mxu0 0
        %933 = vmatmul.mubr.bf16.gmra.mrb[0].mxu0 %v842
        %v934 = vpop.f32.mrb[0].mxu0
        %v935 = vadd.f32 %v793, %v934
        %v936 = vpop.f32.mrb[0].mxu0
        %v937 = vpop.f32.mrb[0].mxu0
        %v938 = vadd.f32 %v793, %v937
        %v939 = vpop.f32.mrb[0].mxu0
        %940 = vdwg.mxu0
        %v941 = vmax.f32 %v879, 0.0
        %v942 = vmax.f32 %v882, 0.0
        %v943 = vmax.f32 %v887, 0.0
        %v944 = vmax.f32 %v890, 0.0
        %v945 = vmax.f32 %v895, 0.0
        %v946 = vmax.f32 %v898, 0.0
        %v947 = vmax.f32 %v903, 0.0
        %v948 = vmax.f32 %v906, 0.0
        %v949 = vmax.f32 %v911, 0.0
        %v950 = vmax.f32 %v914, 0.0
        %v951 = vmax.f32 %v919, 0.0
        %v952 = vmax.f32 %v922, 0.0
        %v953 = vmax.f32 %v927, 0.0
        %v954 = vmax.f32 %v930, 0.0
        %v955 = vmax.f32 %v935, 0.0
        %v956 = vmax.f32 %v938, 0.0
        %v957 = vpack.c.bf16 %v942, %v941
        %v958 = vpack.c.bf16 %v944, %v943
        %v959 = vpack.c.bf16 %v946, %v945
        %v960 = vpack.c.bf16 %v948, %v947
        %v961 = vpack.c.bf16 %v950, %v949
        %v962 = vpack.c.bf16 %v952, %v951
        %v963 = vpack.c.bf16 %v954, %v953
        %v964 = vpack.c.bf16 %v956, %v955
        %v965 = vld [vmem:[%s5] sm:$0xff]
        %v966 = vld [vmem:[%s5 + $0x8] sm:$0xff]
        %v967 = vld [vmem:[%s5 + $0x10] sm:$0xff]
        %v968 = vld [vmem:[%s5 + $0x18] sm:$0xff]
        %v969 = vld [vmem:[%s5 + $0x20] sm:$0xff]
        %v970 = vld [vmem:[%s5 + $0x28] sm:$0xff]
        %v971 = vld [vmem:[%s5 + $0x30] sm:$0xff]
        %v972 = vld [vmem:[%s5 + $0x38] sm:$0xff]
        %v973 = vld [vmem:[%s5 + $0x40] sm:$0xff]
        %v974 = vld [vmem:[%s5 + $0x48] sm:$0xff]
        %v975 = vld [vmem:[%s5 + $0x50] sm:$0xff]
        %v976 = vld [vmem:[%s5 + $0x58] sm:$0xff]
        %v977 = vld [vmem:[%s5 + $0x60] sm:$0xff]
        %v978 = vld [vmem:[%s5 + $0x68] sm:$0xff]
        %v979 = vld [vmem:[%s5 + $0x70] sm:$0xff]
        %v980 = vld [vmem:[%s5 + $0x78] sm:$0xff]
        %v981 = vld [vmem:[%s6] sm:$0x3]
        %v983 = vlaneseq
        %v984 = vshrl.u32 %v983, 7
        %v985 = vsub.s32 0, %v984
        %v986 = vrot.slane %v981, %v985
        %v987 = vlaneseq
        %v988 = vshrl.u32 %v987, 7
        %v989 = vsub.s32 1, %v988
        %v990 = vrot.slane %v981, %v989
        %v1009 = vunpack.c.l.b16 %v965
        %v1010 = vunpack.c.h.b16 %v965
        %v1011 = vunpack.c.l.b16 %v966
        %v1012 = vunpack.c.h.b16 %v966
        %v1013 = vunpack.c.l.b16 %v967
        %v1014 = vunpack.c.h.b16 %v967
        %v1015 = vunpack.c.l.b16 %v968
        %v1016 = vunpack.c.h.b16 %v968
        %v1017 = vunpack.c.l.b16 %v969
        %v1018 = vunpack.c.h.b16 %v969
        %v1019 = vunpack.c.l.b16 %v970
        %v1020 = vunpack.c.h.b16 %v970
        %v1021 = vunpack.c.l.b16 %v971
        %v1022 = vunpack.c.h.b16 %v971
        %v1023 = vunpack.c.l.b16 %v972
        %v1024 = vunpack.c.h.b16 %v972
        %v1025 = vunpack.c.l.b16 %v973
        %v1026 = vunpack.c.h.b16 %v973
        %v1027 = vunpack.c.l.b16 %v974
        %v1028 = vunpack.c.h.b16 %v974
        %v1029 = vunpack.c.l.b16 %v975
        %v1030 = vunpack.c.h.b16 %v975
        %v1031 = vunpack.c.l.b16 %v976
        %v1032 = vunpack.c.h.b16 %v976
        %v1033 = vunpack.c.l.b16 %v977
        %v1034 = vunpack.c.h.b16 %v977
        %v1035 = vunpack.c.l.b16 %v978
        %v1036 = vunpack.c.h.b16 %v978
        %v1037 = vunpack.c.l.b16 %v979
        %v1038 = vunpack.c.h.b16 %v979
        %v1039 = vunpack.c.l.b16 %v980
        %v1040 = vunpack.c.h.b16 %v980
        %v1041 = vpack.c.b16 %v1011, %v1009
        %v1042 = vpack.c.b16 %v1012, %v1010
        %v1043 = vpack.c.b16 %v1015, %v1013
        %v1044 = vpack.c.b16 %v1016, %v1014
        %v1045 = vpack.c.b16 %v1019, %v1017
        %v1046 = vpack.c.b16 %v1020, %v1018
        %v1047 = vpack.c.b16 %v1023, %v1021
        %v1048 = vpack.c.b16 %v1024, %v1022
        %v1049 = vpack.c.b16 %v1027, %v1025
        %v1050 = vpack.c.b16 %v1028, %v1026
        %v1051 = vpack.c.b16 %v1031, %v1029
        %v1052 = vpack.c.b16 %v1032, %v1030
        %v1053 = vpack.c.b16 %v1035, %v1033
        %v1054 = vpack.c.b16 %v1036, %v1034
        %v1055 = vpack.c.b16 %v1039, %v1037
        %v1056 = vpack.c.b16 %v1040, %v1038
        %1073 = vmatprep.subr.bf16.mxu0 %v1042
        %1074 = vmatpush1.bf16.msra.mxu0 %v1041
        %1075 = vmatprep.subr.bf16.mxu0 %v1044
        %1076 = vmatpush1.bf16.msra.mxu0 %v1043
        %1077 = vmatprep.subr.bf16.mxu0 %v1046
        %1078 = vmatpush1.bf16.msra.mxu0 %v1045
        %1079 = vmatprep.subr.bf16.mxu0 %v1048
        %1080 = vmatpush1.bf16.msra.mxu0 %v1047
        %1081 = vmatprep.subr.bf16.mxu0 %v1050
        %1082 = vmatpush1.bf16.msra.mxu0 %v1049
        %1083 = vmatprep.subr.bf16.mxu0 %v1052
        %1084 = vmatpush1.bf16.msra.mxu0 %v1051
        %1085 = vmatprep.subr.bf16.mxu0 %v1054
        %1086 = vmatpush1.bf16.msra.mxu0 %v1053
        %1087 = vmatprep.subr.bf16.mxu0 %v1056
        %1088 = vmatpush1.bf16.msra.mxu0 %v1055
        %1089 = vmatprep.subr.bf16.mxu0 0
        %1090 = vmatpush1.bf16.msra.mxu0 0
        %1091 = vmatprep.subr.bf16.mxu0 0
        %1092 = vmatpush1.bf16.msra.mxu0 0
        %1093 = vmatprep.subr.bf16.mxu0 0
        %1094 = vmatpush1.bf16.msra.mxu0 0
        %1095 = vmatprep.subr.bf16.mxu0 0
        %1096 = vmatpush1.bf16.msra.mxu0 0
        %1097 = vmatprep.subr.bf16.mxu0 0
        %1098 = vmatpush1.bf16.msra.mxu0 0
        %1099 = vmatprep.subr.bf16.mxu0 0
        %1100 = vmatpush1.bf16.msra.mxu0 0
        %1101 = vmatprep.subr.bf16.mxu0 0
        %1102 = vmatpush1.bf16.msra.mxu0 0
        %1103 = vmatprep.subr.bf16.mxu0 0
        %1104 = vmatpush1.bf16.msra.mxu0 0
        %1105 = vmatprep.mubr.bf16.mxu0 0
        %1106 = vmatmul.mubr.bf16.gmra.mrb[0].mxu0 %v957
        %v1107 = vpop.f32.mrb[0].mxu0
        %v1108 = vadd.f32 %v986, %v1107
        %v1109 = vpop.f32.mrb[0].mxu0
        %v1110 = vadd.f32 %v990, %v1109
        %v1111 = vpop.f32.mrb[0].mxu0
        %v1112 = vadd.f32 %v986, %v1111
        %v1113 = vpop.f32.mrb[0].mxu0
        %v1114 = vadd.f32 %v990, %v1113
        %1115 = vmatprep.mubr.bf16.mxu0 0
        %1116 = vmatmul.mubr.bf16.gmra.mrb[0].mxu0 %v958
        %v1117 = vpop.f32.mrb[0].mxu0
        %v1118 = vadd.f32 %v986, %v1117
        %v1119 = vpop.f32.mrb[0].mxu0
        %v1120 = vadd.f32 %v990, %v1119
        %v1121 = vpop.f32.mrb[0].mxu0
        %v1122 = vadd.f32 %v986, %v1121
        %v1123 = vpop.f32.mrb[0].mxu0
        %v1124 = vadd.f32 %v990, %v1123
        %1125 = vmatprep.mubr.bf16.mxu0 0
        %1126 = vmatmul.mubr.bf16.gmra.mrb[0].mxu0 %v959
        %v1127 = vpop.f32.mrb[0].mxu0
        %v1128 = vadd.f32 %v986, %v1127
        %v1129 = vpop.f32.mrb[0].mxu0
        %v1130 = vadd.f32 %v990, %v1129
        %v1131 = vpop.f32.mrb[0].mxu0
        %v1132 = vadd.f32 %v986, %v1131
        %v1133 = vpop.f32.mrb[0].mxu0
        %v1134 = vadd.f32 %v990, %v1133
        %1135 = vmatprep.mubr.bf16.mxu0 0
        %1136 = vmatmul.mubr.bf16.gmra.mrb[0].mxu0 %v960
        %v1137 = vpop.f32.mrb[0].mxu0
        %v1138 = vadd.f32 %v986, %v1137
        %v1139 = vpop.f32.mrb[0].mxu0
        %v1140 = vadd.f32 %v990, %v1139
        %v1141 = vpop.f32.mrb[0].mxu0
        %v1142 = vadd.f32 %v986, %v1141
        %v1143 = vpop.f32.mrb[0].mxu0
        %v1144 = vadd.f32 %v990, %v1143
        %1145 = vmatprep.mubr.bf16.mxu0 0
        %1146 = vmatmul.mubr.bf16.gmra.mrb[0].mxu0 %v961
        %v1147 = vpop.f32.mrb[0].mxu0
        %v1148 = vadd.f32 %v986, %v1147
        %v1149 = vpop.f32.mrb[0].mxu0
        %v1150 = vadd.f32 %v990, %v1149
        %v1151 = vpop.f32.mrb[0].mxu0
        %v1152 = vadd.f32 %v986, %v1151
        %v1153 = vpop.f32.mrb[0].mxu0
        %v1154 = vadd.f32 %v990, %v1153
        %1155 = vmatprep.mubr.bf16.mxu0 0
        %1156 = vmatmul.mubr.bf16.gmra.mrb[0].mxu0 %v962
        %v1157 = vpop.f32.mrb[0].mxu0
        %v1158 = vadd.f32 %v986, %v1157
        %v1159 = vpop.f32.mrb[0].mxu0
        %v1160 = vadd.f32 %v990, %v1159
        %v1161 = vpop.f32.mrb[0].mxu0
        %v1162 = vadd.f32 %v986, %v1161
        %v1163 = vpop.f32.mrb[0].mxu0
        %v1164 = vadd.f32 %v990, %v1163
        %1165 = vmatprep.mubr.bf16.mxu0 0
        %1166 = vmatmul.mubr.bf16.gmra.mrb[0].mxu0 %v963
        %v1167 = vpop.f32.mrb[0].mxu0
        %v1168 = vadd.f32 %v986, %v1167
        %v1169 = vpop.f32.mrb[0].mxu0
        %v1170 = vadd.f32 %v990, %v1169
        %v1171 = vpop.f32.mrb[0].mxu0
        %v1172 = vadd.f32 %v986, %v1171
        %v1173 = vpop.f32.mrb[0].mxu0
        %v1174 = vadd.f32 %v990, %v1173
        %1175 = vmatprep.mubr.bf16.mxu0 0
        %1176 = vmatmul.mubr.bf16.gmra.mrb[0].mxu0 %v964
        %v1177 = vpop.f32.mrb[0].mxu0
        %v1178 = vadd.f32 %v986, %v1177
        %v1179 = vpop.f32.mrb[0].mxu0
        %v1180 = vadd.f32 %v990, %v1179
        %v1181 = vpop.f32.mrb[0].mxu0
        %v1182 = vadd.f32 %v986, %v1181
        %v1183 = vpop.f32.mrb[0].mxu0
        %v1184 = vadd.f32 %v990, %v1183
        %1185 = vdwg.mxu0
        %v1186 = vmax.f32 %v1108, 0.0
        %v1187 = vmax.f32 %v1110, 0.0
        %v1188 = vmax.f32 %v1112, 0.0
        %v1189 = vmax.f32 %v1114, 0.0
        %v1190 = vmax.f32 %v1118, 0.0
        %v1191 = vmax.f32 %v1120, 0.0
        %v1192 = vmax.f32 %v1122, 0.0
        %v1193 = vmax.f32 %v1124, 0.0
        %v1194 = vmax.f32 %v1128, 0.0
        %v1195 = vmax.f32 %v1130, 0.0
        %v1196 = vmax.f32 %v1132, 0.0
        %v1197 = vmax.f32 %v1134, 0.0
        %v1198 = vmax.f32 %v1138, 0.0
        %v1199 = vmax.f32 %v1140, 0.0
        %v1200 = vmax.f32 %v1142, 0.0
        %v1201 = vmax.f32 %v1144, 0.0
        %v1202 = vmax.f32 %v1148, 0.0
        %v1203 = vmax.f32 %v1150, 0.0
        %v1204 = vmax.f32 %v1152, 0.0
        %v1205 = vmax.f32 %v1154, 0.0
        %v1206 = vmax.f32 %v1158, 0.0
        %v1207 = vmax.f32 %v1160, 0.0
        %v1208 = vmax.f32 %v1162, 0.0
        %v1209 = vmax.f32 %v1164, 0.0
        %v1210 = vmax.f32 %v1168, 0.0
        %v1211 = vmax.f32 %v1170, 0.0
        %v1212 = vmax.f32 %v1172, 0.0
        %v1213 = vmax.f32 %v1174, 0.0
        %v1214 = vmax.f32 %v1178, 0.0
        %v1215 = vmax.f32 %v1180, 0.0
        %v1216 = vmax.f32 %v1182, 0.0
        %v1217 = vmax.f32 %v1184, 0.0
        %v1218 = vpack.c.bf16 %v1188, %v1186
        %v1219 = vpack.c.bf16 %v1189, %v1187
        %v1220 = vpack.c.bf16 %v1192, %v1190
        %v1221 = vpack.c.bf16 %v1193, %v1191
        %v1222 = vpack.c.bf16 %v1196, %v1194
        %v1223 = vpack.c.bf16 %v1197, %v1195
        %v1224 = vpack.c.bf16 %v1200, %v1198
        %v1225 = vpack.c.bf16 %v1201, %v1199
        %v1226 = vpack.c.bf16 %v1204, %v1202
        %v1227 = vpack.c.bf16 %v1205, %v1203
        %v1228 = vpack.c.bf16 %v1208, %v1206
        %v1229 = vpack.c.bf16 %v1209, %v1207
        %v1230 = vpack.c.bf16 %v1212, %v1210
        %v1231 = vpack.c.bf16 %v1213, %v1211
        %v1232 = vpack.c.bf16 %v1216, %v1214
        %v1233 = vpack.c.bf16 %v1217, %v1215
        %s1234 = smul.u32 %s32, 16
        %s1235 = smul.addr %s1234, 8
        %s1236 = scalar_lea.vmem [#allocation2], %s1235
        %1237 = vst [vmem:[%s1236] sm:$0xff] %v1218
        %1238 = vst [vmem:[%s1236 + $0x8] sm:$0xff] %v1219
        %1239 = vst [vmem:[%s1236 + $0x10] sm:$0xff] %v1220
        %1240 = vst [vmem:[%s1236 + $0x18] sm:$0xff] %v1221
        %1241 = vst [vmem:[%s1236 + $0x20] sm:$0xff] %v1222
        %1242 = vst [vmem:[%s1236 + $0x28] sm:$0xff] %v1223
        %1243 = vst [vmem:[%s1236 + $0x30] sm:$0xff] %v1224
        %1244 = vst [vmem:[%s1236 + $0x38] sm:$0xff] %v1225
        %1245 = vst [vmem:[%s1236 + $0x40] sm:$0xff] %v1226
        %1246 = vst [vmem:[%s1236 + $0x48] sm:$0xff] %v1227
        %1247 = vst [vmem:[%s1236 + $0x50] sm:$0xff] %v1228
        %1248 = vst [vmem:[%s1236 + $0x58] sm:$0xff] %v1229
        %1249 = vst [vmem:[%s1236 + $0x60] sm:$0xff] %v1230
        %1250 = vst [vmem:[%s1236 + $0x68] sm:$0xff] %v1231
        %1251 = vst [vmem:[%s1236 + $0x70] sm:$0xff] %v1232
        %1252 = vst [vmem:[%s1236 + $0x78] sm:$0xff] %v1233
        %v1253 = vmax.f32 %v1186, %v1190
        %v1254 = vmax.f32 %v1188, %v1192
        %v1255 = vmax.f32 %v1253, %v1194
        %v1256 = vmax.f32 %v1254, %v1196
        %v1257 = vmax.f32 %v1255, %v1198
        %v1258 = vmax.f32 %v1256, %v1200
        %v1259 = vmax.f32 %v1257, %v1202
        %v1260 = vmax.f32 %v1258, %v1204
        %v1261 = vmax.f32 %v1259, %v1206
        %v1262 = vmax.f32 %v1260, %v1208
        %v1263 = vmax.f32 %v1261, %v1210
        %v1264 = vmax.f32 %v1262, %v1212
        %v1265 = vmax.f32 %v1263, %v1214
        %v1266 = vmax.f32 %v1264, %v1216
        %v1267 = vmax.f32 %v1265, %v1266
        %v1268 = vrot.slane %v1267, 4
        %v1269 = vmax.f32 %v1267, %v1268
        %v1270 = vrot.slane %v1269, 2
        %v1271 = vmax.f32 %v1269, %v1270
        %v1272 = vrot.slane %v1271, 1
        %v1273 = vmax.f32 %v1271, %v1272
        %v1274 = vmax.f32 %v1187, %v1191
        %v1275 = vmax.f32 %v1189, %v1193
        %v1276 = vmax.f32 %v1274, %v1195
        %v1277 = vmax.f32 %v1275, %v1197
        %v1278 = vmax.f32 %v1276, %v1199
        %v1279 = vmax.f32 %v1277, %v1201
        %v1280 = vmax.f32 %v1278, %v1203
        %v1281 = vmax.f32 %v1279, %v1205
        %v1282 = vmax.f32 %v1280, %v1207
        %v1283 = vmax.f32 %v1281, %v1209
        %v1284 = vmax.f32 %v1282, %v1211
        %v1285 = vmax.f32 %v1283, %v1213
        %v1286 = vmax.f32 %v1284, %v1215
        %v1287 = vmax.f32 %v1285, %v1217
        %v1288 = vmax.f32 %v1286, %v1287
        %v1289 = vrot.slane %v1288, 4
        %v1290 = vmax.f32 %v1288, %v1289
        %v1291 = vrot.slane %v1290, 2
        %v1292 = vmax.f32 %v1290, %v1291
        %v1293 = vrot.slane %v1292, 1
        %v1294 = vmax.f32 %v1292, %v1293
        %p1295 = scmp.eq.s32.totalorder %s32, 0
        // Predicated region
        $region81: #{landmark_segmentation_net.1} parent=79 // pred_check
          %p1296 = pneg %p1295
        $region82: #{landmark_segmentation_net.1} parent=79 // pred_check_branch
          %1298 = sbr.rel (%p1296) target = $region84
        $region83: #{landmark_segmentation_net.1} parent=79 // pred_region
          %v1301 = vcombine.low %v1273, %v1294
          %v1303 = vunpack.c.l.s4 1966171168
          %v1304 = vunpack.c.0.s8 %v1303
          %v1305 = vlaneseq
          %v1306 = vshrl.u32 %v1305, 7
          %v1307 = vsub.s32 %v1304, %v1306
          %v1308 = vrot.slane %v1301, %v1307
          %v1310 = vunpack.c.l.s4 1966171168
          %v1311 = vunpack.c.0.s8 %v1310
          %v1312 = vlaneseq
          %v1313 = vshrl.u32 %v1312, 7
          %v1314 = vsub.s32 %v1311, %v1313
          %v1315 = vrot.slane %v1308, %v1314
          %v1317 = vlaneseq
          %vm1318 = vcmp.ge.s32.totalorder %v1317, 0
          %vm1319 = vcmp.lt.s32.totalorder %v1317, 256
          %vm1320 = vmand %vm1318, %vm1319
          %1321 = vst.msk [vmem:[#allocation3] sm:$0x3] %vm1320, %v1315
        $region84: #{landmark_segmentation_net.1} parent=79 // pred_fallthru
          _
        %p1322 = scmp.gt.s32.totalorder %s32, 0
        // Predicated region
        $region85: #{landmark_segmentation_net.1} parent=79 // pred_check
          %p1323 = pneg %p1322
        $region86: #{landmark_segmentation_net.1} parent=79 // pred_check_branch
          %1325 = sbr.rel (%p1323) target = $region88
        $region87: #{landmark_segmentation_net.1} parent=79 // pred_region
          %v1326 = vld [vmem:[#allocation3] sm:$0x3]
          %v1329 = vcombine.low %v1273, %v1294
          %v1331 = vunpack.c.l.s4 1966171168
          %v1332 = vunpack.c.0.s8 %v1331
          %v1333 = vlaneseq
          %v1334 = vshrl.u32 %v1333, 7
          %v1335 = vsub.s32 %v1332, %v1334
          %v1336 = vrot.slane %v1329, %v1335
          %v1338 = vunpack.c.l.s4 1966171168
          %v1339 = vunpack.c.0.s8 %v1338
          %v1340 = vlaneseq
          %v1341 = vshrl.u32 %v1340, 7
          %v1342 = vsub.s32 %v1339, %v1341
          %v1343 = vrot.slane %v1336, %v1342
          %v1345 = vmax.f32 %v1326, %v1343
          %v1346 = vlaneseq
          %vm1347 = vcmp.ge.s32.totalorder %v1346, 0
          %vm1348 = vcmp.lt.s32.totalorder %v1346, 256
          %vm1349 = vmand %vm1347, %vm1348
          %1350 = vst.msk [vmem:[#allocation3] sm:$0x3] %vm1349, %v1345
        $region88: #{landmark_segmentation_net.1} parent=79 // pred_fallthru
          _
      $region80: #{landmark_segmentation_net.1} parent=75 // pred_fallthru
        _
      %p1351 = scmp.eq.s32.totalorder %s31, 1
      // Predicated region
      $region89: #{landmark_segmentation_net.1} parent=75 // pred_check
        %p1352 = pneg %p1351
      $region90: #{landmark_segmentation_net.1} parent=75 // pred_check_branch
        %1354 = sbr.rel (%p1352) target = $region92
      $region91: #{landmark_segmentation_net.1} parent=75 // pred_region
        %p1355 = scmp.eq.s32.totalorder %s32, 0
        // Predicated region
        $region93: #{landmark_segmentation_net.1} parent=91 // pred_check
          %p1356 = pneg %p1355
        $region94: #{landmark_segmentation_net.1} parent=91 // pred_check_branch
          %1358 = sbr.rel (%p1356) target = $region96
        $region95: #{landmark_segmentation_net.1} parent=91 // pred_region
          %v1359 = vld [vmem:[#allocation3] sm:$0x3]
          %v1361 = vlaneseq
          %v1362 = vshrl.u32 %v1361, 7
          %v1363 = vsub.s32 0, %v1362
          %v1364 = vrot.slane %v1359, %v1363
          %v1365 = vlaneseq
          %v1366 = vshrl.u32 %v1365, 7
          %v1367 = vsub.s32 1, %v1366
          %v1368 = vrot.slane %v1359, %v1367
          %v1371 = vpack.c.bf16 %v1364, %v1364
          %v1372 = vpack.c.bf16 %v1368, %v1368
          %v1373 = vld [vmem:[%s8] sm:$0xff]
          %v1374 = vld [vmem:[%s8 + $0x8] sm:$0xff]
          %v1375 = vld [vmem:[%s8 + $0x10] sm:$0xff]
          %v1376 = vld [vmem:[%s8 + $0x18] sm:$0xff]
          %v1377 = vld [vmem:[%s8 + $0x20] sm:$0xff]
          %v1378 = vld [vmem:[%s8 + $0x28] sm:$0xff]
          %v1379 = vld [vmem:[%s8 + $0x30] sm:$0xff]
          %v1380 = vld [vmem:[%s8 + $0x38] sm:$0xff]
          %v1381 = vld [vmem:[%s8 + $0x40] sm:$0xff]
          %v1382 = vld [vmem:[%s8 + $0x48] sm:$0xff]
          %v1383 = vld [vmem:[%s8 + $0x50] sm:$0xff]
          %v1384 = vld [vmem:[%s8 + $0x58] sm:$0xff]
          %v1385 = vld [vmem:[%s8 + $0x60] sm:$0xff]
          %v1386 = vld [vmem:[%s8 + $0x68] sm:$0xff]
          %v1387 = vld [vmem:[%s8 + $0x70] sm:$0xff]
          %v1388 = vld [vmem:[%s8 + $0x78] sm:$0xff]
          %v1389 = vld [vmem:[%s8 + $0x80] sm:$0xff]
          %v1390 = vld [vmem:[%s8 + $0x88] sm:$0xff]
          %v1391 = vld [vmem:[%s8 + $0x90] sm:$0xff]
          %v1392 = vld [vmem:[%s8 + $0x98] sm:$0xff]
          %v1393 = vld [vmem:[%s8 + $0xa0] sm:$0xff]
          %v1394 = vld [vmem:[%s8 + $0xa8] sm:$0xff]
          %v1395 = vld [vmem:[%s8 + $0xb0] sm:$0xff]
          %v1396 = vld [vmem:[%s8 + $0xb8] sm:$0xff]
          %v1397 = vld [vmem:[%s8 + $0xc0] sm:$0xff]
          %v1398 = vld [vmem:[%s8 + $0xc8] sm:$0xff]
          %v1399 = vld [vmem:[%s8 + $0xd0] sm:$0xff]
          %v1400 = vld [vmem:[%s8 + $0xd8] sm:$0xff]
          %v1401 = vld [vmem:[%s8 + $0xe0] sm:$0xff]
          %v1402 = vld [vmem:[%s8 + $0xe8] sm:$0xff]
          %v1403 = vld [vmem:[%s8 + $0xf0] sm:$0xff]
          %v1404 = vld [vmem:[%s8 + $0xf8] sm:$0xff]
          %v1405 = vld [vmem:[%s9] sm:$0x3]
          %v1438 = vunpack.c.l.b16 %v1373
          %v1439 = vunpack.c.h.b16 %v1373
          %v1440 = vunpack.c.l.b16 %v1374
          %v1441 = vunpack.c.h.b16 %v1374
          %v1442 = vunpack.c.l.b16 %v1375
          %v1443 = vunpack.c.h.b16 %v1375
          %v1444 = vunpack.c.l.b16 %v1376
          %v1445 = vunpack.c.h.b16 %v1376
          %v1446 = vunpack.c.l.b16 %v1377
          %v1447 = vunpack.c.h.b16 %v1377
          %v1448 = vunpack.c.l.b16 %v1378
          %v1449 = vunpack.c.h.b16 %v1378
          %v1450 = vunpack.c.l.b16 %v1379
          %v1451 = vunpack.c.h.b16 %v1379
          %v1452 = vunpack.c.l.b16 %v1380
          %v1453 = vunpack.c.h.b16 %v1380
          %v1454 = vunpack.c.l.b16 %v1381
          %v1455 = vunpack.c.h.b16 %v1381
          %v1456 = vunpack.c.l.b16 %v1382
          %v1457 = vunpack.c.h.b16 %v1382
          %v1458 = vunpack.c.l.b16 %v1383
          %v1459 = vunpack.c.h.b16 %v1383
          %v1460 = vunpack.c.l.b16 %v1384
          %v1461 = vunpack.c.h.b16 %v1384
          %v1462 = vunpack.c.l.b16 %v1385
          %v1463 = vunpack.c.h.b16 %v1385
          %v1464 = vunpack.c.l.b16 %v1386
          %v1465 = vunpack.c.h.b16 %v1386
          %v1466 = vunpack.c.l.b16 %v1387
          %v1467 = vunpack.c.h.b16 %v1387
          %v1468 = vunpack.c.l.b16 %v1388
          %v1469 = vunpack.c.h.b16 %v1388
          %v1470 = vunpack.c.l.b16 %v1389
          %v1471 = vunpack.c.h.b16 %v1389
          %v1472 = vunpack.c.l.b16 %v1390
          %v1473 = vunpack.c.h.b16 %v1390
          %v1474 = vunpack.c.l.b16 %v1391
          %v1475 = vunpack.c.h.b16 %v1391
          %v1476 = vunpack.c.l.b16 %v1392
          %v1477 = vunpack.c.h.b16 %v1392
          %v1478 = vunpack.c.l.b16 %v1393
          %v1479 = vunpack.c.h.b16 %v1393
          %v1480 = vunpack.c.l.b16 %v1394
          %v1481 = vunpack.c.h.b16 %v1394
          %v1482 = vunpack.c.l.b16 %v1395
          %v1483 = vunpack.c.h.b16 %v1395
          %v1484 = vunpack.c.l.b16 %v1396
          %v1485 = vunpack.c.h.b16 %v1396
          %v1486 = vunpack.c.l.b16 %v1397
          %v1487 = vunpack.c.h.b16 %v1397
          %v1488 = vunpack.c.l.b16 %v1398
          %v1489 = vunpack.c.h.b16 %v1398
          %v1490 = vunpack.c.l.b16 %v1399
          %v1491 = vunpack.c.h.b16 %v1399
          %v1492 = vunpack.c.l.b16 %v1400
          %v1493 = vunpack.c.h.b16 %v1400
          %v1494 = vunpack.c.l.b16 %v1401
          %v1495 = vunpack.c.h.b16 %v1401
          %v1496 = vunpack.c.l.b16 %v1402
          %v1497 = vunpack.c.h.b16 %v1402
          %v1498 = vunpack.c.l.b16 %v1403
          %v1499 = vunpack.c.h.b16 %v1403
          %v1500 = vunpack.c.l.b16 %v1404
          %v1501 = vunpack.c.h.b16 %v1404
          %v1502 = vpack.c.b16 %v1440, %v1438
          %v1503 = vpack.c.b16 %v1441, %v1439
          %v1504 = vpack.c.b16 %v1444, %v1442
          %v1505 = vpack.c.b16 %v1445, %v1443
          %v1506 = vpack.c.b16 %v1448, %v1446
          %v1507 = vpack.c.b16 %v1449, %v1447
          %v1508 = vpack.c.b16 %v1452, %v1450
          %v1509 = vpack.c.b16 %v1453, %v1451
          %v1510 = vpack.c.b16 %v1456, %v1454
          %v1511 = vpack.c.b16 %v1457, %v1455
          %v1512 = vpack.c.b16 %v1460, %v1458
          %v1513 = vpack.c.b16 %v1461, %v1459
          %v1514 = vpack.c.b16 %v1464, %v1462
          %v1515 = vpack.c.b16 %v1465, %v1463
          %v1516 = vpack.c.b16 %v1468, %v1466
          %v1517 = vpack.c.b16 %v1469, %v1467
          %v1518 = vpack.c.b16 %v1472, %v1470
          %v1519 = vpack.c.b16 %v1473, %v1471
          %v1520 = vpack.c.b16 %v1476, %v1474
          %v1521 = vpack.c.b16 %v1477, %v1475
          %v1522 = vpack.c.b16 %v1480, %v1478
          %v1523 = vpack.c.b16 %v1481, %v1479
          %v1524 = vpack.c.b16 %v1484, %v1482
          %v1525 = vpack.c.b16 %v1485, %v1483
          %v1526 = vpack.c.b16 %v1488, %v1486
          %v1527 = vpack.c.b16 %v1489, %v1487
          %v1528 = vpack.c.b16 %v1492, %v1490
          %v1529 = vpack.c.b16 %v1493, %v1491
          %v1530 = vpack.c.b16 %v1496, %v1494
          %v1531 = vpack.c.b16 %v1497, %v1495
          %v1532 = vpack.c.b16 %v1500, %v1498
          %v1533 = vpack.c.b16 %v1501, %v1499
          %v1567 = vlaneseq
          %v1568 = vshrl.u32 %v1567, 7
          %v1569 = vsub.s32 0, %v1568
          %v1570 = vrot.slane %v1405, %v1569
          %v1571 = vlaneseq
          %v1572 = vshrl.u32 %v1571, 7
          %v1573 = vsub.s32 1, %v1572
          %v1574 = vrot.slane %v1405, %v1573
          %1577 = vmatprep.subr.bf16.mxu0 %v1503
          %1578 = vmatpush1.bf16.msra.mxu0 %v1502
          %1579 = vmatprep.subr.bf16.mxu0 %v1505
          %1580 = vmatpush1.bf16.msra.mxu0 %v1504
          %1581 = vmatprep.subr.bf16.mxu0 %v1507
          %1582 = vmatpush1.bf16.msra.mxu0 %v1506
          %1583 = vmatprep.subr.bf16.mxu0 %v1509
          %1584 = vmatpush1.bf16.msra.mxu0 %v1508
          %1585 = vmatprep.subr.bf16.mxu0 %v1511
          %1586 = vmatpush1.bf16.msra.mxu0 %v1510
          %1587 = vmatprep.subr.bf16.mxu0 %v1513
          %1588 = vmatpush1.bf16.msra.mxu0 %v1512
          %1589 = vmatprep.subr.bf16.mxu0 %v1515
          %1590 = vmatpush1.bf16.msra.mxu0 %v1514
          %1591 = vmatprep.subr.bf16.mxu0 %v1517
          %1592 = vmatpush1.bf16.msra.mxu0 %v1516
          %1593 = vmatprep.subr.bf16.mxu0 %v1519
          %1594 = vmatpush1.bf16.msra.mxu0 %v1518
          %1595 = vmatprep.subr.bf16.mxu0 %v1521
          %1596 = vmatpush1.bf16.msra.mxu0 %v1520
          %1597 = vmatprep.subr.bf16.mxu0 %v1523
          %1598 = vmatpush1.bf16.msra.mxu0 %v1522
          %1599 = vmatprep.subr.bf16.mxu0 %v1525
          %1600 = vmatpush1.bf16.msra.mxu0 %v1524
          %1601 = vmatprep.subr.bf16.mxu0 %v1527
          %1602 = vmatpush1.bf16.msra.mxu0 %v1526
          %1603 = vmatprep.subr.bf16.mxu0 %v1529
          %1604 = vmatpush1.bf16.msra.mxu0 %v1528
          %1605 = vmatprep.subr.bf16.mxu0 %v1531
          %1606 = vmatpush1.bf16.msra.mxu0 %v1530
          %1607 = vmatprep.subr.bf16.mxu0 %v1533
          %1608 = vmatpush1.bf16.msra.mxu0 %v1532
          %1609 = vmatprep.mubr.bf16.mxu0 %v1372
          %1610 = vmatmul.mubr.bf16.gmra.mrb[0].mxu0 %v1371
          %v1611 = vpop.f32.mrb[0].mxu0
          %v1612 = vadd.f32 %v1570, %v1611
          %v1613 = vpop.f32.mrb[0].mxu0
          %v1614 = vadd.f32 %v1574, %v1613
          %v1615 = vpop.f32.mrb[0].mxu0
          %v1616 = vpop.f32.mrb[0].mxu0
          %1617 = vdwg.mxu0
          %v1620 = vcombine.low %v1612, %v1614
          %v1622 = vunpack.c.l.s4 1966171168
          %v1623 = vunpack.c.0.s8 %v1622
          %v1624 = vlaneseq
          %v1625 = vshrl.u32 %v1624, 7
          %v1626 = vsub.s32 %v1623, %v1625
          %v1627 = vrot.slane %v1620, %v1626
          %v1629 = vunpack.c.l.s4 1966171168
          %v1630 = vunpack.c.0.s8 %v1629
          %v1631 = vlaneseq
          %v1632 = vshrl.u32 %v1631, 7
          %v1633 = vsub.s32 %v1630, %v1632
          %v1634 = vrot.slane %v1627, %v1633
          %v1636 = vlaneseq
          %vm1637 = vcmp.ge.s32.totalorder %v1636, 0
          %vm1638 = vcmp.lt.s32.totalorder %v1636, 256
          %vm1639 = vmand %vm1637, %vm1638
          %1640 = vst.msk [vmem:[#allocation4] sm:$0x3] %vm1639, %v1634
        $region96: #{landmark_segmentation_net.1} parent=91 // pred_fallthru
          _
        %s1641 = smul.u32 %s32, 16
        %s1642 = smul.addr %s1641, 8
        %s1643 = scalar_lea.vmem [#allocation2], %s1642
        %v1644 = vld [vmem:[%s1643] sm:$0xff]
        %v1645 = vld [vmem:[%s1643 + $0x8] sm:$0xff]
        %v1646 = vld [vmem:[%s1643 + $0x10] sm:$0xff]
        %v1647 = vld [vmem:[%s1643 + $0x18] sm:$0xff]
        %v1648 = vld [vmem:[%s1643 + $0x20] sm:$0xff]
        %v1649 = vld [vmem:[%s1643 + $0x28] sm:$0xff]
        %v1650 = vld [vmem:[%s1643 + $0x30] sm:$0xff]
        %v1651 = vld [vmem:[%s1643 + $0x38] sm:$0xff]
        %v1652 = vld [vmem:[%s1643 + $0x40] sm:$0xff]
        %v1653 = vld [vmem:[%s1643 + $0x48] sm:$0xff]
        %v1654 = vld [vmem:[%s1643 + $0x50] sm:$0xff]
        %v1655 = vld [vmem:[%s1643 + $0x58] sm:$0xff]
        %v1656 = vld [vmem:[%s1643 + $0x60] sm:$0xff]
        %v1657 = vld [vmem:[%s1643 + $0x68] sm:$0xff]
        %v1658 = vld [vmem:[%s1643 + $0x70] sm:$0xff]
        %v1659 = vld [vmem:[%s1643 + $0x78] sm:$0xff]
        %v1660 = vld [vmem:[%s7] sm:$0xff]
        %v1661 = vld [vmem:[%s7 + $0x8] sm:$0xff]
        %v1662 = vld [vmem:[%s7 + $0x10] sm:$0xff]
        %v1663 = vld [vmem:[%s7 + $0x18] sm:$0xff]
        %v1664 = vld [vmem:[%s7 + $0x20] sm:$0xff]
        %v1665 = vld [vmem:[%s7 + $0x28] sm:$0xff]
        %v1666 = vld [vmem:[%s7 + $0x30] sm:$0xff]
        %v1667 = vld [vmem:[%s7 + $0x38] sm:$0xff]
        %v1668 = vld [vmem:[%s7 + $0x40] sm:$0xff]
        %v1669 = vld [vmem:[%s7 + $0x48] sm:$0xff]
        %v1670 = vld [vmem:[%s7 + $0x50] sm:$0xff]
        %v1671 = vld [vmem:[%s7 + $0x58] sm:$0xff]
        %v1672 = vld [vmem:[%s7 + $0x60] sm:$0xff]
        %v1673 = vld [vmem:[%s7 + $0x68] sm:$0xff]
        %v1674 = vld [vmem:[%s7 + $0x70] sm:$0xff]
        %v1675 = vld [vmem:[%s7 + $0x78] sm:$0xff]
        %v1676 = vld [vmem:[%s7 + $0x80] sm:$0xff]
        %v1677 = vld [vmem:[%s7 + $0x88] sm:$0xff]
        %v1678 = vld [vmem:[%s7 + $0x90] sm:$0xff]
        %v1679 = vld [vmem:[%s7 + $0x98] sm:$0xff]
        %v1680 = vld [vmem:[%s7 + $0xa0] sm:$0xff]
        %v1681 = vld [vmem:[%s7 + $0xa8] sm:$0xff]
        %v1682 = vld [vmem:[%s7 + $0xb0] sm:$0xff]
        %v1683 = vld [vmem:[%s7 + $0xb8] sm:$0xff]
        %v1684 = vld [vmem:[%s7 + $0xc0] sm:$0xff]
        %v1685 = vld [vmem:[%s7 + $0xc8] sm:$0xff]
        %v1686 = vld [vmem:[%s7 + $0xd0] sm:$0xff]
        %v1687 = vld [vmem:[%s7 + $0xd8] sm:$0xff]
        %v1688 = vld [vmem:[%s7 + $0xe0] sm:$0xff]
        %v1689 = vld [vmem:[%s7 + $0xe8] sm:$0xff]
        %v1690 = vld [vmem:[%s7 + $0xf0] sm:$0xff]
        %v1691 = vld [vmem:[%s7 + $0xf8] sm:$0xff]
        %v1692 = vld [vmem:[#allocation4] sm:$0x3]
        %v1694 = vlaneseq
        %v1695 = vshrl.u32 %v1694, 7
        %v1696 = vsub.s32 0, %v1695
        %v1697 = vrot.slane %v1692, %v1696
        %v1698 = vlaneseq
        %v1699 = vshrl.u32 %v1698, 7
        %v1700 = vsub.s32 1, %v1699
        %v1701 = vrot.slane %v1692, %v1700
        %v1736 = vunpack.c.l.b16 %v1660
        %v1737 = vunpack.c.h.b16 %v1660
        %v1738 = vunpack.c.l.b16 %v1661
        %v1739 = vunpack.c.h.b16 %v1661
        %v1740 = vunpack.c.l.b16 %v1662
        %v1741 = vunpack.c.h.b16 %v1662
        %v1742 = vunpack.c.l.b16 %v1663
        %v1743 = vunpack.c.h.b16 %v1663
        %v1744 = vunpack.c.l.b16 %v1664
        %v1745 = vunpack.c.h.b16 %v1664
        %v1746 = vunpack.c.l.b16 %v1665
        %v1747 = vunpack.c.h.b16 %v1665
        %v1748 = vunpack.c.l.b16 %v1666
        %v1749 = vunpack.c.h.b16 %v1666
        %v1750 = vunpack.c.l.b16 %v1667
        %v1751 = vunpack.c.h.b16 %v1667
        %v1752 = vunpack.c.l.b16 %v1668
        %v1753 = vunpack.c.h.b16 %v1668
        %v1754 = vunpack.c.l.b16 %v1669
        %v1755 = vunpack.c.h.b16 %v1669
        %v1756 = vunpack.c.l.b16 %v1670
        %v1757 = vunpack.c.h.b16 %v1670
        %v1758 = vunpack.c.l.b16 %v1671
        %v1759 = vunpack.c.h.b16 %v1671
        %v1760 = vunpack.c.l.b16 %v1672
        %v1761 = vunpack.c.h.b16 %v1672
        %v1762 = vunpack.c.l.b16 %v1673
        %v1763 = vunpack.c.h.b16 %v1673
        %v1764 = vunpack.c.l.b16 %v1674
        %v1765 = vunpack.c.h.b16 %v1674
        %v1766 = vunpack.c.l.b16 %v1675
        %v1767 = vunpack.c.h.b16 %v1675
        %v1768 = vunpack.c.l.b16 %v1676
        %v1769 = vunpack.c.h.b16 %v1676
        %v1770 = vunpack.c.l.b16 %v1677
        %v1771 = vunpack.c.h.b16 %v1677
        %v1772 = vunpack.c.l.b16 %v1678
        %v1773 = vunpack.c.h.b16 %v1678
        %v1774 = vunpack.c.l.b16 %v1679
        %v1775 = vunpack.c.h.b16 %v1679
        %v1776 = vunpack.c.l.b16 %v1680
        %v1777 = vunpack.c.h.b16 %v1680
        %v1778 = vunpack.c.l.b16 %v1681
        %v1779 = vunpack.c.h.b16 %v1681
        %v1780 = vunpack.c.l.b16 %v1682
        %v1781 = vunpack.c.h.b16 %v1682
        %v1782 = vunpack.c.l.b16 %v1683
        %v1783 = vunpack.c.h.b16 %v1683
        %v1784 = vunpack.c.l.b16 %v1684
        %v1785 = vunpack.c.h.b16 %v1684
        %v1786 = vunpack.c.l.b16 %v1685
        %v1787 = vunpack.c.h.b16 %v1685
        %v1788 = vunpack.c.l.b16 %v1686
        %v1789 = vunpack.c.h.b16 %v1686
        %v1790 = vunpack.c.l.b16 %v1687
        %v1791 = vunpack.c.h.b16 %v1687
        %v1792 = vunpack.c.l.b16 %v1688
        %v1793 = vunpack.c.h.b16 %v1688
        %v1794 = vunpack.c.l.b16 %v1689
        %v1795 = vunpack.c.h.b16 %v1689
        %v1796 = vunpack.c.l.b16 %v1690
        %v1797 = vunpack.c.h.b16 %v1690
        %v1798 = vunpack.c.l.b16 %v1691
        %v1799 = vunpack.c.h.b16 %v1691
        %v1800 = vpack.c.b16 %v1738, %v1736
        %v1801 = vpack.c.b16 %v1739, %v1737
        %v1802 = vpack.c.b16 %v1742, %v1740
        %v1803 = vpack.c.b16 %v1743, %v1741
        %v1804 = vpack.c.b16 %v1746, %v1744
        %v1805 = vpack.c.b16 %v1747, %v1745
        %v1806 = vpack.c.b16 %v1750, %v1748
        %v1807 = vpack.c.b16 %v1751, %v1749
        %v1808 = vpack.c.b16 %v1754, %v1752
        %v1809 = vpack.c.b16 %v1755, %v1753
        %v1810 = vpack.c.b16 %v1758, %v1756
        %v1811 = vpack.c.b16 %v1759, %v1757
        %v1812 = vpack.c.b16 %v1762, %v1760
        %v1813 = vpack.c.b16 %v1763, %v1761
        %v1814 = vpack.c.b16 %v1766, %v1764
        %v1815 = vpack.c.b16 %v1767, %v1765
        %v1816 = vpack.c.b16 %v1770, %v1768
        %v1817 = vpack.c.b16 %v1771, %v1769
        %v1818 = vpack.c.b16 %v1774, %v1772
        %v1819 = vpack.c.b16 %v1775, %v1773
        %v1820 = vpack.c.b16 %v1778, %v1776
        %v1821 = vpack.c.b16 %v1779, %v1777
        %v1822 = vpack.c.b16 %v1782, %v1780
        %v1823 = vpack.c.b16 %v1783, %v1781
        %v1824 = vpack.c.b16 %v1786, %v1784
        %v1825 = vpack.c.b16 %v1787, %v1785
        %v1826 = vpack.c.b16 %v1790, %v1788
        %v1827 = vpack.c.b16 %v1791, %v1789
        %v1828 = vpack.c.b16 %v1794, %v1792
        %v1829 = vpack.c.b16 %v1795, %v1793
        %v1830 = vpack.c.b16 %v1798, %v1796
        %v1831 = vpack.c.b16 %v1799, %v1797
        %1864 = vmatprep.subr.bf16.mxu0 %v1801
        %1865 = vmatpush1.bf16.msra.mxu0 %v1800
        %1866 = vmatprep.subr.bf16.mxu0 %v1803
        %1867 = vmatpush1.bf16.msra.mxu0 %v1802
        %1868 = vmatprep.subr.bf16.mxu0 %v1805
        %1869 = vmatpush1.bf16.msra.mxu0 %v1804
        %1870 = vmatprep.subr.bf16.mxu0 %v1807
        %1871 = vmatpush1.bf16.msra.mxu0 %v1806
        %1872 = vmatprep.subr.bf16.mxu0 %v1809
        %1873 = vmatpush1.bf16.msra.mxu0 %v1808
        %1874 = vmatprep.subr.bf16.mxu0 %v1811
        %1875 = vmatpush1.bf16.msra.mxu0 %v1810
        %1876 = vmatprep.subr.bf16.mxu0 %v1813
        %1877 = vmatpush1.bf16.msra.mxu0 %v1812
        %1878 = vmatprep.subr.bf16.mxu0 %v1815
        %1879 = vmatpush1.bf16.msra.mxu0 %v1814
        %1880 = vmatprep.subr.bf16.mxu0 %v1817
        %1881 = vmatpush1.bf16.msra.mxu0 %v1816
        %1882 = vmatprep.subr.bf16.mxu0 %v1819
        %1883 = vmatpush1.bf16.msra.mxu0 %v1818
        %1884 = vmatprep.subr.bf16.mxu0 %v1821
        %1885 = vmatpush1.bf16.msra.mxu0 %v1820
        %1886 = vmatprep.subr.bf16.mxu0 %v1823
        %1887 = vmatpush1.bf16.msra.mxu0 %v1822
        %1888 = vmatprep.subr.bf16.mxu0 %v1825
        %1889 = vmatpush1.bf16.msra.mxu0 %v1824
        %1890 = vmatprep.subr.bf16.mxu0 %v1827
        %1891 = vmatpush1.bf16.msra.mxu0 %v1826
        %1892 = vmatprep.subr.bf16.mxu0 %v1829
        %1893 = vmatpush1.bf16.msra.mxu0 %v1828
        %1894 = vmatprep.subr.bf16.mxu0 %v1831
        %1895 = vmatpush1.bf16.msra.mxu0 %v1830
        %1896 = vmatprep.mubr.bf16.mxu0 %v1645
        %1897 = vmatmul.mubr.bf16.gmra.mrb[0].mxu0 %v1644
        %v1898 = vpop.f32.mrb[0].mxu0
        %v1899 = vadd.f32 %v1697, %v1898
        %v1900 = vpop.f32.mrb[0].mxu0
        %v1901 = vadd.f32 %v1701, %v1900
        %v1902 = vpop.f32.mrb[0].mxu0
        %v1903 = vadd.f32 %v1697, %v1902
        %v1904 = vpop.f32.mrb[0].mxu0
        %v1905 = vadd.f32 %v1701, %v1904
        %1906 = vmatprep.mubr.bf16.mxu0 %v1647
        %1907 = vmatmul.mubr.bf16.gmra.mrb[0].mxu0 %v1646
        %v1908 = vpop.f32.mrb[0].mxu0
        %v1909 = vadd.f32 %v1697, %v1908
        %v1910 = vpop.f32.mrb[0].mxu0
        %v1911 = vadd.f32 %v1701, %v1910
        %v1912 = vpop.f32.mrb[0].mxu0
        %v1913 = vadd.f32 %v1697, %v1912
        %v1914 = vpop.f32.mrb[0].mxu0
        %v1915 = vadd.f32 %v1701, %v1914
        %1916 = vmatprep.mubr.bf16.mxu0 %v1649
        %1917 = vmatmul.mubr.bf16.gmra.mrb[0].mxu0 %v1648
        %v1918 = vpop.f32.mrb[0].mxu0
        %v1919 = vadd.f32 %v1697, %v1918
        %v1920 = vpop.f32.mrb[0].mxu0
        %v1921 = vadd.f32 %v1701, %v1920
        %v1922 = vpop.f32.mrb[0].mxu0
        %v1923 = vadd.f32 %v1697, %v1922
        %v1924 = vpop.f32.mrb[0].mxu0
        %v1925 = vadd.f32 %v1701, %v1924
        %1926 = vmatprep.mubr.bf16.mxu0 %v1651
        %1927 = vmatmul.mubr.bf16.gmra.mrb[0].mxu0 %v1650
        %v1928 = vpop.f32.mrb[0].mxu0
        %v1929 = vadd.f32 %v1697, %v1928
        %v1930 = vpop.f32.mrb[0].mxu0
        %v1931 = vadd.f32 %v1701, %v1930
        %v1932 = vpop.f32.mrb[0].mxu0
        %v1933 = vadd.f32 %v1697, %v1932
        %v1934 = vpop.f32.mrb[0].mxu0
        %v1935 = vadd.f32 %v1701, %v1934
        %1936 = vmatprep.mubr.bf16.mxu0 %v1653
        %1937 = vmatmul.mubr.bf16.gmra.mrb[0].mxu0 %v1652
        %v1938 = vpop.f32.mrb[0].mxu0
        %v1939 = vadd.f32 %v1697, %v1938
        %v1940 = vpop.f32.mrb[0].mxu0
        %v1941 = vadd.f32 %v1701, %v1940
        %v1942 = vpop.f32.mrb[0].mxu0
        %v1943 = vadd.f32 %v1697, %v1942
        %v1944 = vpop.f32.mrb[0].mxu0
        %v1945 = vadd.f32 %v1701, %v1944
        %1946 = vmatprep.mubr.bf16.mxu0 %v1655
        %1947 = vmatmul.mubr.bf16.gmra.mrb[0].mxu0 %v1654
        %v1948 = vpop.f32.mrb[0].mxu0
        %v1949 = vadd.f32 %v1697, %v1948
        %v1950 = vpop.f32.mrb[0].mxu0
        %v1951 = vadd.f32 %v1701, %v1950
        %v1952 = vpop.f32.mrb[0].mxu0
        %v1953 = vadd.f32 %v1697, %v1952
        %v1954 = vpop.f32.mrb[0].mxu0
        %v1955 = vadd.f32 %v1701, %v1954
        %1956 = vmatprep.mubr.bf16.mxu0 %v1657
        %1957 = vmatmul.mubr.bf16.gmra.mrb[0].mxu0 %v1656
        %v1958 = vpop.f32.mrb[0].mxu0
        %v1959 = vadd.f32 %v1697, %v1958
        %v1960 = vpop.f32.mrb[0].mxu0
        %v1961 = vadd.f32 %v1701, %v1960
        %v1962 = vpop.f32.mrb[0].mxu0
        %v1963 = vadd.f32 %v1697, %v1962
        %v1964 = vpop.f32.mrb[0].mxu0
        %v1965 = vadd.f32 %v1701, %v1964
        %1966 = vmatprep.mubr.bf16.mxu0 %v1659
        %1967 = vmatmul.mubr.bf16.gmra.mrb[0].mxu0 %v1658
        %v1968 = vpop.f32.mrb[0].mxu0
        %v1969 = vadd.f32 %v1697, %v1968
        %v1970 = vpop.f32.mrb[0].mxu0
        %v1971 = vadd.f32 %v1701, %v1970
        %v1972 = vpop.f32.mrb[0].mxu0
        %v1973 = vadd.f32 %v1697, %v1972
        %v1974 = vpop.f32.mrb[0].mxu0
        %v1975 = vadd.f32 %v1701, %v1974
        %1976 = vdwg.mxu0
        %v1977 = vmax.f32 %v1899, 0.0
        %v1978 = vmax.f32 %v1901, 0.0
        %v1979 = vmax.f32 %v1903, 0.0
        %v1980 = vmax.f32 %v1905, 0.0
        %v1981 = vmax.f32 %v1909, 0.0
        %v1982 = vmax.f32 %v1911, 0.0
        %v1983 = vmax.f32 %v1913, 0.0
        %v1984 = vmax.f32 %v1915, 0.0
        %v1985 = vmax.f32 %v1919, 0.0
        %v1986 = vmax.f32 %v1921, 0.0
        %v1987 = vmax.f32 %v1923, 0.0
        %v1988 = vmax.f32 %v1925, 0.0
        %v1989 = vmax.f32 %v1929, 0.0
        %v1990 = vmax.f32 %v1931, 0.0
        %v1991 = vmax.f32 %v1933, 0.0
        %v1992 = vmax.f32 %v1935, 0.0
        %v1993 = vmax.f32 %v1939, 0.0
        %v1994 = vmax.f32 %v1941, 0.0
        %v1995 = vmax.f32 %v1943, 0.0
        %v1996 = vmax.f32 %v1945, 0.0
        %v1997 = vmax.f32 %v1949, 0.0
        %v1998 = vmax.f32 %v1951, 0.0
        %v1999 = vmax.f32 %v1953, 0.0
        %v2000 = vmax.f32 %v1955, 0.0
        %v2001 = vmax.f32 %v1959, 0.0
        %v2002 = vmax.f32 %v1961, 0.0
        %v2003 = vmax.f32 %v1963, 0.0
        %v2004 = vmax.f32 %v1965, 0.0
        %v2005 = vmax.f32 %v1969, 0.0
        %v2006 = vmax.f32 %v1971, 0.0
        %v2007 = vmax.f32 %v1973, 0.0
        %v2008 = vmax.f32 %v1975, 0.0
        %v2009 = vpack.c.bf16 %v1979, %v1977
        %v2010 = vpack.c.bf16 %v1980, %v1978
        %v2011 = vpack.c.bf16 %v1983, %v1981
        %v2012 = vpack.c.bf16 %v1984, %v1982
        %v2013 = vpack.c.bf16 %v1987, %v1985
        %v2014 = vpack.c.bf16 %v1988, %v1986
        %v2015 = vpack.c.bf16 %v1991, %v1989
        %v2016 = vpack.c.bf16 %v1992, %v1990
        %v2017 = vpack.c.bf16 %v1995, %v1993
        %v2018 = vpack.c.bf16 %v1996, %v1994
        %v2019 = vpack.c.bf16 %v1999, %v1997
        %v2020 = vpack.c.bf16 %v2000, %v1998
        %v2021 = vpack.c.bf16 %v2003, %v2001
        %v2022 = vpack.c.bf16 %v2004, %v2002
        %v2023 = vpack.c.bf16 %v2007, %v2005
        %v2024 = vpack.c.bf16 %v2008, %v2006
        %v2025 = vld [vmem:[%s10] sm:$0xf]
        %v2026 = vld [vmem:[%s10 + $0x4] sm:$0xf]
        %v2027 = vld [vmem:[%s10 + $0x8] sm:$0xf]
        %v2028 = vld [vmem:[%s10 + $0xc] sm:$0xf]
        %v2029 = vld [vmem:[%s10 + $0x10] sm:$0xf]
        %v2030 = vld [vmem:[%s10 + $0x14] sm:$0xf]
        %v2031 = vld [vmem:[%s10 + $0x18] sm:$0xf]
        %v2032 = vld [vmem:[%s10 + $0x1c] sm:$0xf]
        %v2033 = vld [vmem:[%s10 + $0x20] sm:$0xf]
        %v2034 = vld [vmem:[%s10 + $0x24] sm:$0xf]
        %v2035 = vld [vmem:[%s10 + $0x28] sm:$0xf]
        %v2036 = vld [vmem:[%s10 + $0x2c] sm:$0xf]
        %v2037 = vld [vmem:[%s10 + $0x30] sm:$0xf]
        %v2038 = vld [vmem:[%s10 + $0x34] sm:$0xf]
        %v2039 = vld [vmem:[%s10 + $0x38] sm:$0xf]
        %v2040 = vld [vmem:[%s10 + $0x3c] sm:$0xf]
        %v2041 = vld [vmem:[%s10 + $0x40] sm:$0xf]
        %v2042 = vld [vmem:[%s10 + $0x44] sm:$0xf]
        %v2043 = vld [vmem:[%s10 + $0x48] sm:$0xf]
        %v2044 = vld [vmem:[%s10 + $0x4c] sm:$0xf]
        %v2045 = vld [vmem:[%s10 + $0x50] sm:$0xf]
        %v2046 = vld [vmem:[%s10 + $0x54] sm:$0xf]
        %v2047 = vld [vmem:[%s10 + $0x58] sm:$0xf]
        %v2048 = vld [vmem:[%s10 + $0x5c] sm:$0xf]
        %v2049 = vld [vmem:[%s10 + $0x60] sm:$0xf]
        %v2050 = vld [vmem:[%s10 + $0x64] sm:$0xf]
        %v2051 = vld [vmem:[%s10 + $0x68] sm:$0xf]
        %v2052 = vld [vmem:[%s10 + $0x6c] sm:$0xf]
        %v2053 = vld [vmem:[%s10 + $0x70] sm:$0xf]
        %v2054 = vld [vmem:[%s10 + $0x74] sm:$0xf]
        %v2055 = vld [vmem:[%s10 + $0x78] sm:$0xf]
        %v2056 = vld [vmem:[%s10 + $0x7c] sm:$0xf]
        %v2057 = vld [vmem:[%s11] sm:$0x1]
        %v2059 = vlaneseq
        %v2060 = vshrl.u32 %v2059, 7
        %v2061 = vsub.s32 0, %v2060
        %v2062 = vrot.slane %v2057, %v2061
        %v2096 = vunpack.c.l.b16 %v2025
        %v2097 = vunpack.c.l.b16 %v2026
        %v2098 = vunpack.c.l.b16 %v2027
        %v2099 = vunpack.c.l.b16 %v2028
        %v2100 = vunpack.c.l.b16 %v2029
        %v2101 = vunpack.c.l.b16 %v2030
        %v2102 = vunpack.c.l.b16 %v2031
        %v2103 = vunpack.c.l.b16 %v2032
        %v2104 = vunpack.c.l.b16 %v2033
        %v2105 = vunpack.c.l.b16 %v2034
        %v2106 = vunpack.c.l.b16 %v2035
        %v2107 = vunpack.c.l.b16 %v2036
        %v2108 = vunpack.c.l.b16 %v2037
        %v2109 = vunpack.c.l.b16 %v2038
        %v2110 = vunpack.c.l.b16 %v2039
        %v2111 = vunpack.c.l.b16 %v2040
        %v2112 = vunpack.c.l.b16 %v2041
        %v2113 = vunpack.c.l.b16 %v2042
        %v2114 = vunpack.c.l.b16 %v2043
        %v2115 = vunpack.c.l.b16 %v2044
        %v2116 = vunpack.c.l.b16 %v2045
        %v2117 = vunpack.c.l.b16 %v2046
        %v2118 = vunpack.c.l.b16 %v2047
        %v2119 = vunpack.c.l.b16 %v2048
        %v2120 = vunpack.c.l.b16 %v2049
        %v2121 = vunpack.c.l.b16 %v2050
        %v2122 = vunpack.c.l.b16 %v2051
        %v2123 = vunpack.c.l.b16 %v2052
        %v2124 = vunpack.c.l.b16 %v2053
        %v2125 = vunpack.c.l.b16 %v2054
        %v2126 = vunpack.c.l.b16 %v2055
        %v2127 = vunpack.c.l.b16 %v2056
        %v2128 = vpack.c.b16 %v2097, %v2096
        %v2129 = vpack.c.b16 %v2099, %v2098
        %v2130 = vpack.c.b16 %v2101, %v2100
        %v2131 = vpack.c.b16 %v2103, %v2102
        %v2132 = vpack.c.b16 %v2105, %v2104
        %v2133 = vpack.c.b16 %v2107, %v2106
        %v2134 = vpack.c.b16 %v2109, %v2108
        %v2135 = vpack.c.b16 %v2111, %v2110
        %v2136 = vpack.c.b16 %v2113, %v2112
        %v2137 = vpack.c.b16 %v2115, %v2114
        %v2138 = vpack.c.b16 %v2117, %v2116
        %v2139 = vpack.c.b16 %v2119, %v2118
        %v2140 = vpack.c.b16 %v2121, %v2120
        %v2141 = vpack.c.b16 %v2123, %v2122
        %v2142 = vpack.c.b16 %v2125, %v2124
        %v2143 = vpack.c.b16 %v2127, %v2126
        %2160 = vmatprep.subr.bf16.mxu0 0
        %2161 = vmatpush1.bf16.msra.mxu0 %v2128
        %2162 = vmatprep.subr.bf16.mxu0 0
        %2163 = vmatpush1.bf16.msra.mxu0 %v2129
        %2164 = vmatprep.subr.bf16.mxu0 0
        %2165 = vmatpush1.bf16.msra.mxu0 %v2130
        %2166 = vmatprep.subr.bf16.mxu0 0
        %2167 = vmatpush1.bf16.msra.mxu0 %v2131
        %2168 = vmatprep.subr.bf16.mxu0 0
        %2169 = vmatpush1.bf16.msra.mxu0 %v2132
        %2170 = vmatprep.subr.bf16.mxu0 0
        %2171 = vmatpush1.bf16.msra.mxu0 %v2133
        %2172 = vmatprep.subr.bf16.mxu0 0
        %2173 = vmatpush1.bf16.msra.mxu0 %v2134
        %2174 = vmatprep.subr.bf16.mxu0 0
        %2175 = vmatpush1.bf16.msra.mxu0 %v2135
        %2176 = vmatprep.subr.bf16.mxu0 0
        %2177 = vmatpush1.bf16.msra.mxu0 %v2136
        %2178 = vmatprep.subr.bf16.mxu0 0
        %2179 = vmatpush1.bf16.msra.mxu0 %v2137
        %2180 = vmatprep.subr.bf16.mxu0 0
        %2181 = vmatpush1.bf16.msra.mxu0 %v2138
        %2182 = vmatprep.subr.bf16.mxu0 0
        %2183 = vmatpush1.bf16.msra.mxu0 %v2139
        %2184 = vmatprep.subr.bf16.mxu0 0
        %2185 = vmatpush1.bf16.msra.mxu0 %v2140
        %2186 = vmatprep.subr.bf16.mxu0 0
        %2187 = vmatpush1.bf16.msra.mxu0 %v2141
        %2188 = vmatprep.subr.bf16.mxu0 0
        %2189 = vmatpush1.bf16.msra.mxu0 %v2142
        %2190 = vmatprep.subr.bf16.mxu0 0
        %2191 = vmatpush1.bf16.msra.mxu0 %v2143
        %2192 = vmatprep.mubr.bf16.mxu0 %v2010
        %2193 = vmatmul.mubr.bf16.gmra.mrb[0].mxu0 %v2009
        %v2194 = vpop.f32.mrb[0].mxu0
        %v2195 = vadd.f32 %v2062, %v2194
        %v2196 = vpop.f32.mrb[0].mxu0
        %v2197 = vpop.f32.mrb[0].mxu0
        %v2198 = vadd.f32 %v2062, %v2197
        %v2199 = vpop.f32.mrb[0].mxu0
        %2200 = vmatprep.mubr.bf16.mxu0 %v2012
        %2201 = vmatmul.mubr.bf16.gmra.mrb[0].mxu0 %v2011
        %v2202 = vpop.f32.mrb[0].mxu0
        %v2203 = vadd.f32 %v2062, %v2202
        %v2204 = vpop.f32.mrb[0].mxu0
        %v2205 = vpop.f32.mrb[0].mxu0
        %v2206 = vadd.f32 %v2062, %v2205
        %v2207 = vpop.f32.mrb[0].mxu0
        %2208 = vmatprep.mubr.bf16.mxu0 %v2014
        %2209 = vmatmul.mubr.bf16.gmra.mrb[0].mxu0 %v2013
        %v2210 = vpop.f32.mrb[0].mxu0
        %v2211 = vadd.f32 %v2062, %v2210
        %v2212 = vpop.f32.mrb[0].mxu0
        %v2213 = vpop.f32.mrb[0].mxu0
        %v2214 = vadd.f32 %v2062, %v2213
        %v2215 = vpop.f32.mrb[0].mxu0
        %2216 = vmatprep.mubr.bf16.mxu0 %v2016
        %2217 = vmatmul.mubr.bf16.gmra.mrb[0].mxu0 %v2015
        %v2218 = vpop.f32.mrb[0].mxu0
        %v2219 = vadd.f32 %v2062, %v2218
        %v2220 = vpop.f32.mrb[0].mxu0
        %v2221 = vpop.f32.mrb[0].mxu0
        %v2222 = vadd.f32 %v2062, %v2221
        %v2223 = vpop.f32.mrb[0].mxu0
        %2224 = vmatprep.mubr.bf16.mxu0 %v2018
        %2225 = vmatmul.mubr.bf16.gmra.mrb[0].mxu0 %v2017
        %v2226 = vpop.f32.mrb[0].mxu0
        %v2227 = vadd.f32 %v2062, %v2226
        %v2228 = vpop.f32.mrb[0].mxu0
        %v2229 = vpop.f32.mrb[0].mxu0
        %v2230 = vadd.f32 %v2062, %v2229
        %v2231 = vpop.f32.mrb[0].mxu0
        %2232 = vmatprep.mubr.bf16.mxu0 %v2020
        %2233 = vmatmul.mubr.bf16.gmra.mrb[0].mxu0 %v2019
        %v2234 = vpop.f32.mrb[0].mxu0
        %v2235 = vadd.f32 %v2062, %v2234
        %v2236 = vpop.f32.mrb[0].mxu0
        %v2237 = vpop.f32.mrb[0].mxu0
        %v2238 = vadd.f32 %v2062, %v2237
        %v2239 = vpop.f32.mrb[0].mxu0
        %2240 = vmatprep.mubr.bf16.mxu0 %v2022
        %2241 = vmatmul.mubr.bf16.gmra.mrb[0].mxu0 %v2021
        %v2242 = vpop.f32.mrb[0].mxu0
        %v2243 = vadd.f32 %v2062, %v2242
        %v2244 = vpop.f32.mrb[0].mxu0
        %v2245 = vpop.f32.mrb[0].mxu0
        %v2246 = vadd.f32 %v2062, %v2245
        %v2247 = vpop.f32.mrb[0].mxu0
        %2248 = vmatprep.mubr.bf16.mxu0 %v2024
        %2249 = vmatmul.mubr.bf16.gmra.mrb[0].mxu0 %v2023
        %v2250 = vpop.f32.mrb[0].mxu0
        %v2251 = vadd.f32 %v2062, %v2250
        %v2252 = vpop.f32.mrb[0].mxu0
        %v2253 = vpop.f32.mrb[0].mxu0
        %v2254 = vadd.f32 %v2062, %v2253
        %v2255 = vpop.f32.mrb[0].mxu0
        %2256 = vdwg.mxu0
        %v2257 = vmax.f32 %v2195, 0.0
        %v2258 = vmax.f32 %v2198, 0.0
        %v2259 = vmax.f32 %v2203, 0.0
        %v2260 = vmax.f32 %v2206, 0.0
        %v2261 = vmax.f32 %v2211, 0.0
        %v2262 = vmax.f32 %v2214, 0.0
        %v2263 = vmax.f32 %v2219, 0.0
        %v2264 = vmax.f32 %v2222, 0.0
        %v2265 = vmax.f32 %v2227, 0.0
        %v2266 = vmax.f32 %v2230, 0.0
        %v2267 = vmax.f32 %v2235, 0.0
        %v2268 = vmax.f32 %v2238, 0.0
        %v2269 = vmax.f32 %v2243, 0.0
        %v2270 = vmax.f32 %v2246, 0.0
        %v2271 = vmax.f32 %v2251, 0.0
        %v2272 = vmax.f32 %v2254, 0.0
        %v2273 = vpack.c.bf16 %v2258, %v2257
        %v2274 = vpack.c.bf16 %v2260, %v2259
        %v2275 = vpack.c.bf16 %v2262, %v2261
        %v2276 = vpack.c.bf16 %v2264, %v2263
        %v2277 = vpack.c.bf16 %v2266, %v2265
        %v2278 = vpack.c.bf16 %v2268, %v2267
        %v2279 = vpack.c.bf16 %v2270, %v2269
        %v2280 = vpack.c.bf16 %v2272, %v2271
        %v2281 = vld [vmem:[%s12] sm:$0xf]
        %v2282 = vld [vmem:[%s12 + $0x4] sm:$0xf]
        %v2283 = vld [vmem:[%s12 + $0x8] sm:$0xf]
        %v2284 = vld [vmem:[%s12 + $0xc] sm:$0xf]
        %v2285 = vld [vmem:[%s12 + $0x10] sm:$0xf]
        %v2286 = vld [vmem:[%s12 + $0x14] sm:$0xf]
        %v2287 = vld [vmem:[%s12 + $0x18] sm:$0xf]
        %v2288 = vld [vmem:[%s12 + $0x1c] sm:$0xf]
        %v2289 = vld [vmem:[%s12 + $0x20] sm:$0xf]
        %v2290 = vld [vmem:[%s12 + $0x24] sm:$0xf]
        %v2291 = vld [vmem:[%s12 + $0x28] sm:$0xf]
        %v2292 = vld [vmem:[%s12 + $0x2c] sm:$0xf]
        %v2293 = vld [vmem:[%s12 + $0x30] sm:$0xf]
        %v2294 = vld [vmem:[%s12 + $0x34] sm:$0xf]
        %v2295 = vld [vmem:[%s12 + $0x38] sm:$0xf]
        %v2296 = vld [vmem:[%s12 + $0x3c] sm:$0xf]
        %v2297 = vld [vmem:[%s13] sm:$0x1]
        %v2299 = vlaneseq
        %v2300 = vshrl.u32 %v2299, 7
        %v2301 = vsub.s32 0, %v2300
        %v2302 = vrot.slane %v2297, %v2301
        %v2320 = vunpack.c.l.b16 %v2281
        %v2321 = vunpack.c.l.b16 %v2282
        %v2322 = vunpack.c.l.b16 %v2283
        %v2323 = vunpack.c.l.b16 %v2284
        %v2324 = vunpack.c.l.b16 %v2285
        %v2325 = vunpack.c.l.b16 %v2286
        %v2326 = vunpack.c.l.b16 %v2287
        %v2327 = vunpack.c.l.b16 %v2288
        %v2328 = vunpack.c.l.b16 %v2289
        %v2329 = vunpack.c.l.b16 %v2290
        %v2330 = vunpack.c.l.b16 %v2291
        %v2331 = vunpack.c.l.b16 %v2292
        %v2332 = vunpack.c.l.b16 %v2293
        %v2333 = vunpack.c.l.b16 %v2294
        %v2334 = vunpack.c.l.b16 %v2295
        %v2335 = vunpack.c.l.b16 %v2296
        %v2336 = vpack.c.b16 %v2321, %v2320
        %v2337 = vpack.c.b16 %v2323, %v2322
        %v2338 = vpack.c.b16 %v2325, %v2324
        %v2339 = vpack.c.b16 %v2327, %v2326
        %v2340 = vpack.c.b16 %v2329, %v2328
        %v2341 = vpack.c.b16 %v2331, %v2330
        %v2342 = vpack.c.b16 %v2333, %v2332
        %v2343 = vpack.c.b16 %v2335, %v2334
        %2352 = vmatprep.subr.bf16.mxu0 0
        %2353 = vmatpush1.bf16.msra.mxu0 %v2336
        %2354 = vmatprep.subr.bf16.mxu0 0
        %2355 = vmatpush1.bf16.msra.mxu0 %v2337
        %2356 = vmatprep.subr.bf16.mxu0 0
        %2357 = vmatpush1.bf16.msra.mxu0 %v2338
        %2358 = vmatprep.subr.bf16.mxu0 0
        %2359 = vmatpush1.bf16.msra.mxu0 %v2339
        %2360 = vmatprep.subr.bf16.mxu0 0
        %2361 = vmatpush1.bf16.msra.mxu0 %v2340
        %2362 = vmatprep.subr.bf16.mxu0 0
        %2363 = vmatpush1.bf16.msra.mxu0 %v2341
        %2364 = vmatprep.subr.bf16.mxu0 0
        %2365 = vmatpush1.bf16.msra.mxu0 %v2342
        %2366 = vmatprep.subr.bf16.mxu0 0
        %2367 = vmatpush1.bf16.msra.mxu0 %v2343
        %2368 = vmatprep.subr.bf16.mxu0 0
        %2369 = vmatpush1.bf16.msra.mxu0 0
        %2370 = vmatprep.subr.bf16.mxu0 0
        %2371 = vmatpush1.bf16.msra.mxu0 0
        %2372 = vmatprep.subr.bf16.mxu0 0
        %2373 = vmatpush1.bf16.msra.mxu0 0
        %2374 = vmatprep.subr.bf16.mxu0 0
        %2375 = vmatpush1.bf16.msra.mxu0 0
        %2376 = vmatprep.subr.bf16.mxu0 0
        %2377 = vmatpush1.bf16.msra.mxu0 0
        %2378 = vmatprep.subr.bf16.mxu0 0
        %2379 = vmatpush1.bf16.msra.mxu0 0
        %2380 = vmatprep.subr.bf16.mxu0 0
        %2381 = vmatpush1.bf16.msra.mxu0 0
        %2382 = vmatprep.subr.bf16.mxu0 0
        %2383 = vmatpush1.bf16.msra.mxu0 0
        %2384 = vmatprep.mubr.bf16.mxu0 0
        %2385 = vmatmul.mubr.bf16.gmra.mrb[0].mxu0 %v2273
        %v2386 = vpop.f32.mrb[0].mxu0
        %v2387 = vadd.f32 %v2302, %v2386
        %v2388 = vpop.f32.mrb[0].mxu0
        %v2389 = vpop.f32.mrb[0].mxu0
        %v2390 = vadd.f32 %v2302, %v2389
        %v2391 = vpop.f32.mrb[0].mxu0
        %2392 = vmatprep.mubr.bf16.mxu0 0
        %2393 = vmatmul.mubr.bf16.gmra.mrb[0].mxu0 %v2274
        %v2394 = vpop.f32.mrb[0].mxu0
        %v2395 = vadd.f32 %v2302, %v2394
        %v2396 = vpop.f32.mrb[0].mxu0
        %v2397 = vpop.f32.mrb[0].mxu0
        %v2398 = vadd.f32 %v2302, %v2397
        %v2399 = vpop.f32.mrb[0].mxu0
        %2400 = vmatprep.mubr.bf16.mxu0 0
        %2401 = vmatmul.mubr.bf16.gmra.mrb[0].mxu0 %v2275
        %v2402 = vpop.f32.mrb[0].mxu0
        %v2403 = vadd.f32 %v2302, %v2402
        %v2404 = vpop.f32.mrb[0].mxu0
        %v2405 = vpop.f32.mrb[0].mxu0
        %v2406 = vadd.f32 %v2302, %v2405
        %v2407 = vpop.f32.mrb[0].mxu0
        %2408 = vmatprep.mubr.bf16.mxu0 0
        %2409 = vmatmul.mubr.bf16.gmra.mrb[0].mxu0 %v2276
        %v2410 = vpop.f32.mrb[0].mxu0
        %v2411 = vadd.f32 %v2302, %v2410
        %v2412 = vpop.f32.mrb[0].mxu0
        %v2413 = vpop.f32.mrb[0].mxu0
        %v2414 = vadd.f32 %v2302, %v2413
        %v2415 = vpop.f32.mrb[0].mxu0
        %2416 = vmatprep.mubr.bf16.mxu0 0
        %2417 = vmatmul.mubr.bf16.gmra.mrb[0].mxu0 %v2277
        %v2418 = vpop.f32.mrb[0].mxu0
        %v2419 = vadd.f32 %v2302, %v2418
        %v2420 = vpop.f32.mrb[0].mxu0
        %v2421 = vpop.f32.mrb[0].mxu0
        %v2422 = vadd.f32 %v2302, %v2421
        %v2423 = vpop.f32.mrb[0].mxu0
        %2424 = vmatprep.mubr.bf16.mxu0 0
        %2425 = vmatmul.mubr.bf16.gmra.mrb[0].mxu0 %v2278
        %v2426 = vpop.f32.mrb[0].mxu0
        %v2427 = vadd.f32 %v2302, %v2426
        %v2428 = vpop.f32.mrb[0].mxu0
        %v2429 = vpop.f32.mrb[0].mxu0
        %v2430 = vadd.f32 %v2302, %v2429
        %v2431 = vpop.f32.mrb[0].mxu0
        %2432 = vmatprep.mubr.bf16.mxu0 0
        %2433 = vmatmul.mubr.bf16.gmra.mrb[0].mxu0 %v2279
        %v2434 = vpop.f32.mrb[0].mxu0
        %v2435 = vadd.f32 %v2302, %v2434
        %v2436 = vpop.f32.mrb[0].mxu0
        %v2437 = vpop.f32.mrb[0].mxu0
        %v2438 = vadd.f32 %v2302, %v2437
        %v2439 = vpop.f32.mrb[0].mxu0
        %2440 = vmatprep.mubr.bf16.mxu0 0
        %2441 = vmatmul.mubr.bf16.gmra.mrb[0].mxu0 %v2280
        %v2442 = vpop.f32.mrb[0].mxu0
        %v2443 = vadd.f32 %v2302, %v2442
        %v2444 = vpop.f32.mrb[0].mxu0
        %v2445 = vpop.f32.mrb[0].mxu0
        %v2446 = vadd.f32 %v2302, %v2445
        %v2447 = vpop.f32.mrb[0].mxu0
        %2448 = vdwg.mxu0
        %vm2449 = vcmask 64512
        %2450 = vst.msk [vmem:[%s530] sm:$0xff] %vm2449, %v2387
        %2451 = vst.msk [vmem:[%s530 + $0x8] sm:$0xff] %vm2449, %v2390
        %2452 = vst.msk [vmem:[%s530 + $0x10] sm:$0xff] %vm2449, %v2395
        %2453 = vst.msk [vmem:[%s530 + $0x18] sm:$0xff] %vm2449, %v2398
        %2454 = vst.msk [vmem:[%s530 + $0x20] sm:$0xff] %vm2449, %v2403
        %2455 = vst.msk [vmem:[%s530 + $0x28] sm:$0xff] %vm2449, %v2406
        %2456 = vst.msk [vmem:[%s530 + $0x30] sm:$0xff] %vm2449, %v2411
        %2457 = vst.msk [vmem:[%s530 + $0x38] sm:$0xff] %vm2449, %v2414
        %2458 = vst.msk [vmem:[%s530 + $0x40] sm:$0xff] %vm2449, %v2419
        %2459 = vst.msk [vmem:[%s530 + $0x48] sm:$0xff] %vm2449, %v2422
        %2460 = vst.msk [vmem:[%s530 + $0x50] sm:$0xff] %vm2449, %v2427
        %2461 = vst.msk [vmem:[%s530 + $0x58] sm:$0xff] %vm2449, %v2430
        %2462 = vst.msk [vmem:[%s530 + $0x60] sm:$0xff] %vm2449, %v2435
        %2463 = vst.msk [vmem:[%s530 + $0x68] sm:$0xff] %vm2449, %v2438
        %2464 = vst.msk [vmem:[%s530 + $0x70] sm:$0xff] %vm2449, %v2443
        %2465 = vst.msk [vmem:[%s530 + $0x78] sm:$0xff] %vm2449, %v2446
      $region92: #{landmark_segmentation_net.1} parent=75 // pred_fallthru
        _
      %s2466 = smul.u32 %s32, %s31
      %s2467 = smul.u32 16, %s2466
      %p2468 = scmp.lt.s32.totalorder %s30, 1
      %s2469 = scalar_select %p2468, %s30, 1
      %p2470 = scmp.lt.s32.totalorder %s2467, 63
      %s2471 = scalar_select %p2470, %s2467, 63
      %s2472 = smul.addr %s2469, 64
      %s2473 = sadd.s32 %s2471, %s2472
      %s2474 = smul.addr %s2473, 8
      %s2475 = scalar_lea.vmem %s14, %s2474
      // Predicated region
      $region97: #{landmark_segmentation_net.1} parent=75 // pred_check
        %p2476 = pneg %p371
      $region98: #{landmark_segmentation_net.1} parent=75 // pred_check_branch
        %2478 = sbr.rel (%p2476) target = $region100
      $region99: #{landmark_segmentation_net.1} parent=75 // pred_region
        %s2479 = smul.u32 %s32, %s31
        %s2480 = smul.u32 16, %s2479
      $region100: #{landmark_segmentation_net.1} parent=75 // pred_fallthru
        _
    $region76: #{landmark_segmentation_net.1} parent=5 // pred_fallthru
      _
    %p2481 = scmp.le.s32.totalorder 2, %s20
    // Predicated region
    $region101: #{landmark_segmentation_net.1} parent=5 // pred_check
      %p2482 = pneg %p2481
    $region102: #{landmark_segmentation_net.1} parent=5 // pred_check_branch
      %2484 = sbr.rel (%p2482) target = $region104
    $region103: #{landmark_segmentation_net.1} parent=5 // pred_region
      %s2485 = ssub.s32 %s20, 2
      // Predicated region
      $region105: #{landmark_segmentation_net.1} parent=103 // pred_check
        %p2486 = pneg %p377
      $region106: #{landmark_segmentation_net.1} parent=103 // pred_check_branch
        %2488 = sbr.rel (%p2486) target = $region108
      $region107: #{landmark_segmentation_net.1} parent=103 // pred_region
        %s2489 = smul.u32 %s35, %s34
        %s2490 = smul.u32 16, %s2489
        %p2491 = scmp.lt.s32.totalorder %s33, 1
        %s2492 = scalar_select %p2491, %s33, 1
        %p2493 = scmp.lt.s32.totalorder %s2490, 63
        %s2494 = scalar_select %p2493, %s2490, 63
        %s2495 = smul.addr %s2492, 64
        %s2496 = sadd.s32 %s2494, %s2495
        %s2497 = smul.addr %s2496, 8
        %s2498 = scalar_lea.vmem %s14, %s2497
      $region108: #{landmark_segmentation_net.1} parent=103 // pred_fallthru
        _
    $region104: #{landmark_segmentation_net.1} parent=5 // pred_fallthru
      _
  $region6: #{landmark_segmentation_net.1} parent=0 // loop_footer
    %s24 = sadd.s32 1, %s20
  $region7: #{landmark_segmentation_net.1} parent=0 // loop_footer_branch
    %19 = sbr.rel target = $region3
  $region8: #{landmark_segmentation_net.1} parent=0 // loop_exit
    _

</llo_original>
